<compile_context>
chip_gen: v7x
topology: tpu7x:2x2x1
jax: 0.10.0
libtpu: 0.0.40
codegen_flags: <defaults>
</compile_context>

<pallas_src>
import functools

import jax
import jax.numpy as jnp
from jax.experimental import pallas as pl
from jax.experimental.pallas import tpu as pltpu

IGNORE_INDEX = -100
_MIB = 2 ** 20


# ----------------------------------------------------------------------------
# helpers
# ----------------------------------------------------------------------------
def _layernorm(x, g, b, eps=1e-5):
    mu = jnp.mean(x, axis=-1, keepdims=True)
    var = jnp.mean((x - mu) ** 2, axis=-1, keepdims=True)
    return (x - mu) * jax.lax.rsqrt(var + eps) * g + b


def _bf16(x):
    return x.astype(jnp.bfloat16)


def _batched_spec(shape):
    """Per-grid-step block: leading dim squeezed, rest full-extent."""
    rest = tuple(int(d) for d in shape[1:])
    n = len(rest)
    return pl.BlockSpec((pl.Squeezed(),) + rest,
                        lambda g, _n=n: (g,) + (0,) * _n)


def _weight_spec(shape):
    """Grid-invariant weight: full extent, SINGLE-buffered (saves VMEM)."""
    shp = tuple(int(d) for d in shape)
    n = len(shp)
    return pl.BlockSpec(shp, lambda g, _n=n: (0,) * _n,
                        pipeline_mode=pl.Buffered(1))


# ----------------------------------------------------------------------------
# Fused kernel body.  One grid step == b_tile batch rows, flattened to
# M = b_tile * S rows for all row-wise matmuls (fills the MXU M dimension).
# ----------------------------------------------------------------------------
def _fused_body(emb_ref, bias_ref, bio_m_ref, gen_m_ref,
                ln_e_g, ln_e_b, wqkv, bqkv, wo, bo,
                ln1_g, ln1_b, w1, b1, w2, b2, ln2_g, ln2_b,
                w_tr, b_tr, w_clsb, w_clsg, b_cls,
                comb_ref, logits_ref, *, num_heads, b_tile, seq_len):
    M, H = emb_ref.shape
    S = seq_len
    DH = H // num_heads

    # ---- embedding LayerNorm (f32 on VPU) -----------------------------------
    x = _layernorm(emb_ref[...], ln_e_g[...], ln_e_b[...])             # (M, H)

    # ---- fused QKV projection: one (M,H)@(H,3H) bf16 matmul, f32 acc --------
    # (1/sqrt(DH) attention scale already folded into wq / bq at pack time)
    qkv = jnp.dot(_bf16(x), wqkv[...],
                  preferred_element_type=jnp.float32) + bqkv[...]      # (M, 3H)

    bias = bias_ref[...]                                               # (b_tile, S)

    # ---- attention: per batch row / per head, statically unrolled -----------
    # TODO(synk): keep per-head slice offsets 128-lane aligned for the real
    # backbone (NH=12, DH=64); and 'qd,kd->qk' implies an XLU transpose of K
    # per head -- pre-transpose K if bundle dumps show XLU as the binding slot.
    ctx_rows = []
    for b in range(b_tile):
        r0 = b * S
        bias_b = bias[b:b + 1, :]                                      # (1, S)
        heads = []
        for h in range(num_heads):
            lo = h * DH
            qh = qkv[r0:r0 + S, lo:lo + DH]
            kh = qkv[r0:r0 + S, H + lo:H + lo + DH]
            vh = qkv[r0:r0 + S, 2 * H + lo:2 * H + lo + DH]
            s = jnp.einsum('qd,kd->qk', _bf16(qh), _bf16(kh),
                           preferred_element_type=jnp.float32) + bias_b
            s = s - jnp.max(s, axis=-1, keepdims=True)
            e = jnp.exp(s)
            p = e * pl.reciprocal(jnp.sum(e, axis=-1, keepdims=True),
                                  approx=True)
            heads.append(jnp.dot(_bf16(p), _bf16(vh),
                                 preferred_element_type=jnp.float32))  # (S, DH)
        ctx_b = heads[0] if num_heads == 1 else jnp.concatenate(heads, axis=-1)
        ctx_rows.append(ctx_b)                                         # (S, H)
    ctx = ctx_rows[0] if b_tile == 1 else jnp.concatenate(ctx_rows, axis=0)

    attn = jnp.dot(_bf16(ctx), wo[...],
                   preferred_element_type=jnp.float32) + bo[...]
    x = _layernorm(x + attn, ln1_g[...], ln1_b[...])

    # ---- FFN ----------------------------------------------------------------
    # TODO(synk): torch.nn.GELU default is exact erf; tanh approximation used.
    # TODO(synk): tile the FFN contraction over I once the full backbone's
    # (S,I) h_mid / FFN weights no longer fit resident on v7x's 64 MiB VMEM.
    h_mid = jax.nn.gelu(
        jnp.dot(_bf16(x), w1[...], preferred_element_type=jnp.float32) + b1[...],
        approximate=True)
    ffn = jnp.dot(_bf16(h_mid), w2[...],
                  preferred_element_type=jnp.float32) + b2[...]
    seq = _layernorm(x + ffn, ln2_g[...], ln2_b[...])                  # (M, H)
    # dropout == identity (eval mode)

    # ---- multi-task head ----------------------------------------------------
    # Both per-task transforms done as one (M,H)@(H,2H) matmul; halves are
    # lane-aligned slices.  For the masked branch: (m ⊙ x) @ W == m ⊙ (x @ W)
    # since the entity masks are per-row scalars, so the mask is applied after
    # the matmul as an implicit lane-broadcast multiply.
    t = jnp.dot(_bf16(seq), w_tr[...],
                preferred_element_type=jnp.float32)                    # (M, 2H)
    t_bio = t[:, :H]
    t_gen = t[:, H:]
    if bio_m_ref is not None:
        t_bio = t_bio * bio_m_ref[...]                                 # (M,1) bcast
        t_gen = t_gen * gen_m_ref[...]
    f_bio = jnp.maximum(t_bio + b_tr[:, :H], 0.0)                      # (M, H)
    f_gen = jnp.maximum(t_gen + b_tr[:, H:], 0.0)                      # (M, H)

    # combined features: lane-dense (lane 0) store into their own output slab
    comb_ref[...] = f_bio + f_gen                                      # (M, H)

    # classifiers: per-task weights pre-padded to (H, 2L) so results land in
    # [bio | general] lanes directly (no narrow lane concat).
    logits_ref[...] = (
        jnp.dot(_bf16(f_bio), w_clsb[...], preferred_element_type=jnp.float32)
        + jnp.dot(_bf16(f_gen), w_clsg[...], preferred_element_type=jnp.float32)
        + b_cls[...])                                                  # (M, 2L)


def _kernel_general(emb_ref, bias_ref, *rest, num_heads, b_tile, seq_len):
    _fused_body(emb_ref, bias_ref, None, None, *rest,
                num_heads=num_heads, b_tile=b_tile, seq_len=seq_len)


def _kernel_masked(emb_ref, bias_ref, bio_m_ref, gen_m_ref, *rest,
                   num_heads, b_tile, seq_len):
    _fused_body(emb_ref, bias_ref, bio_m_ref, gen_m_ref, *rest,
                num_heads=num_heads, b_tile=b_tile, seq_len=seq_len)


# ----------------------------------------------------------------------------
# pallas_call wrapper
# ----------------------------------------------------------------------------
def fused_forward(pp, emb, bias, bio_m, gen_m, *, num_heads, num_labels,
                  general_branch, core_parallel=False):
    B, S, H = emb.shape
    L = num_labels

    # Fill the MXU M dimension: merge batch rows per grid step.  Target >=256
    # rows on v6e/v7x (2x256x256 MXU); S should be a multiple of 8 so the
    # per-batch row slices stay sublane-aligned.
    target = max(1, -(-256 // S))
    b_tile = max(d for d in range(1, B + 1) if B % d == 0 and d <= target)
    G = B // b_tile
    M = b_tile * S

    emb_g = emb.reshape(G, M, H)
    bias_g = bias.reshape(G, b_tile, S)
    batched = [emb_g, bias_g]
    if not general_branch:
        batched += [bio_m.reshape(G, M, 1), gen_m.reshape(G, M, 1)]

    weights = (pp['ln_e_g'], pp['ln_e_b'], pp['wqkv'], pp['bqkv'],
               pp['wo'], pp['bo'], pp['ln1_g'], pp['ln1_b'],
               pp['w1'], pp['b1'], pp['w2'], pp['b2'],
               pp['ln2_g'], pp['ln2_b'],
               pp['w_tr'], pp['b_tr'], pp['w_clsb'], pp['w_clsg'], pp['b_cls'])

    in_specs = ([_batched_spec(a.shape) for a in batched]
                + [_weight_spec(w.shape) for w in weights])
    out_shape = (jax.ShapeDtypeStruct((G, M, H), jnp.float32),
                 jax.ShapeDtypeStruct((G, M, 2 * L), jnp.float32))
    out_specs = (_batched_spec((G, M, H)), _batched_spec((G, M, 2 * L)))

    # Explicit VMEM budget: weights (single-buffered) + 2x streamed in/out
    # blocks + f32 activation temps, 2x headroom, clamped to 64 MiB (v7x).
    inter = int(pp['w1'].shape[1])
    w_bytes = sum(int(w.size) * w.dtype.itemsize for w in weights)
    in_blk = sum((int(a.size) // G) * a.dtype.itemsize for a in batched)
    out_blk = (M * H + M * 2 * L) * 4
    act_bytes = 4 * (M * (6 * H + 3 * H + inter + 4 * H)
                     + b_tile * num_heads * S * S)
    vmem_limit = int(min(64 * _MIB,
                         max(32 * _MIB,
                             2 * (w_bytes + 2 * in_blk + 2 * out_blk
                                  + act_bytes))))

    # On v7x pass core_parallel=True to shard the batch grid over the 2 TCs.
    sem = (pltpu.CORE_PARALLEL,) if core_parallel else ("parallel",)

    kernel = _kernel_general if general_branch else _kernel_masked
    comb, logits_cat = pl.pallas_call(
        functools.partial(kernel, num_heads=num_heads, b_tile=b_tile,
                          seq_len=S),
        grid=(G,),
        in_specs=in_specs,
        out_specs=out_specs,
        out_shape=out_shape,
        compiler_params=pltpu.CompilerParams(
            dimension_semantics=sem,
            vmem_limit_bytes=vmem_limit),
    )(*batched, *weights)

    comb = comb.reshape(B, S, H)
    logits_cat = logits_cat.reshape(B, S, 2 * L)
    return comb, logits_cat[..., :L], logits_cat[..., L:]


# ----------------------------------------------------------------------------
# CrossEntropyLoss (mean over non-ignored tokens, ignore_index=-100), JAX glue
# ----------------------------------------------------------------------------
def cross_entropy_loss(logits_2d, labels_1d):
    valid = labels_1d != IGNORE_INDEX
    safe = jnp.where(valid, labels_1d, 0)
    logp = jax.nn.log_softmax(logits_2d, axis=-1)
    nll = -jnp.take_along_axis(logp, safe[:, None], axis=-1)[:, 0]
    nll = jnp.where(valid, nll, 0.0)
    denom = jnp.maximum(jnp.sum(valid.astype(jnp.float32)), 1.0)
    return jnp.sum(nll) / denom


# ----------------------------------------------------------------------------
# Full forward (mirrors MultiTaskRobertaNER.forward).
# `general_branch` is a STATIC flag the caller resolves on the host once
# (mirrors `entity_type_ids[0][0].item() == 0`), so the whole forward jits.
# ----------------------------------------------------------------------------
@functools.partial(jax.jit, static_argnames=("general_branch", "num_heads",
                                             "num_labels", "core_parallel"))
def forward(packed_params, input_ids, token_type_ids=None, attention_mask=None,
            labels=None, entity_type_ids=None, *,
            general_branch=True, num_heads=2, num_labels=3,
            core_parallel=False):
    del token_type_ids  # TODO(synk): token-type embeddings of the real backbone
    B, S = input_ids.shape
    L = num_labels

    # Embeddings glue (word + position gathers); encoder LN is in the kernel.
    emb = (packed_params['word_emb'][input_ids]
           + packed_params['pos_emb'][:S][None, :, :])

    # Additive attention bias precomputed once here (not per grid step).
    if attention_mask is not None:
        att_f = attention_mask.astype(jnp.float32)
    else:
        att_f = jnp.ones((B, S), jnp.float32)
    bias = (1.0 - att_f) * (-1e9)                                       # (B, S)

    if general_branch:
        bio_m = gen_m = None
    else:
        bio_m = ((entity_type_ids > 0) & (entity_type_ids <= 9)
                 ).astype(jnp.float32)                                  # (B, S)
        gen_m = (entity_type_ids == 0).astype(jnp.float32)              # (B, S)

    combined_features, bio_logits, general_logits = fused_forward(
        packed_params, emb, bias, bio_m, gen_m,
        num_heads=num_heads, num_labels=num_labels,
        general_branch=general_branch, core_parallel=core_parallel)

    if general_branch:
        logits = (bio_logits, general_logits)
    else:
        logits = bio_logits + general_logits
    outputs = (logits, combined_features)

    if labels is not None:
        flat_labels = labels.reshape(-1)
        if attention_mask is not None:
            active_mask = attention_mask.reshape(-1) == 1
            active_labels = jnp.where(active_mask, flat_labels,
                                      jnp.full_like(flat_labels, IGNORE_INDEX))
            if general_branch:
                bio_loss = cross_entropy_loss(bio_logits.reshape(-1, L),
                                              active_labels)
                general_loss = cross_entropy_loss(general_logits.reshape(-1, L),
                                                  active_labels)
                total_loss = bio_loss + general_loss
            else:
                total_loss = cross_entropy_loss(logits.reshape(-1, L),
                                                active_labels)
            return (total_loss,) + outputs
        else:
            if general_branch:
                # torch reference would crash here (tuple.view); sum both tasks
                total_loss = (cross_entropy_loss(bio_logits.reshape(-1, L),
                                                 flat_labels)
                              + cross_entropy_loss(general_logits.reshape(-1, L),
                                                   flat_labels))
            else:
                total_loss = cross_entropy_loss(logits.reshape(-1, L),
                                                flat_labels)
            return total_loss
    return logits


# ----------------------------------------------------------------------------
# Deterministic parameter init (module-shaped) + packing for the fused kernel.
# Linear weights stored as (in_features, out_features): y = x @ W + b.
# ----------------------------------------------------------------------------
def init_params(key, vocab, max_pos, hidden, inter, num_labels):
    ks = jax.random.split(key, 12)
    n = lambda k, shape: 0.02 * jax.random.normal(k, shape, jnp.float32)
    H, I, L = hidden, inter, num_labels
    return dict(
        word_emb=n(ks[0], (vocab, H)),
        pos_emb=n(ks[1], (max_pos, H)),
        ln_e_g=jnp.ones((1, H), jnp.float32), ln_e_b=jnp.zeros((1, H), jnp.float32),
        wq=n(ks[2], (H, H)), bq=jnp.zeros((1, H), jnp.float32),
        wk=n(ks[3], (H, H)), bk=jnp.zeros((1, H), jnp.float32),
        wv=n(ks[4], (H, H)), bv=jnp.zeros((1, H), jnp.float32),
        wo=n(ks[5], (H, H)), bo=jnp.zeros((1, H), jnp.float32),
        ln1_g=jnp.ones((1, H), jnp.float32), ln1_b=jnp.zeros((1, H), jnp.float32),
        w1=n(ks[6], (H, I)), b1=jnp.zeros((1, I), jnp.float32),
        w2=n(ks[7], (I, H)), b2=jnp.zeros((1, H), jnp.float32),
        ln2_g=jnp.ones((1, H), jnp.float32), ln2_b=jnp.zeros((1, H), jnp.float32),
        w_gen_t=n(ks[8], (H, H)), b_gen_t=jnp.zeros((1, H), jnp.float32),
        w_bio_t=n(ks[9], (H, H)), b_bio_t=jnp.zeros((1, H), jnp.float32),
        w_gen_c=n(ks[10], (H, L)), b_gen_c=jnp.zeros((1, L), jnp.float32),
        w_bio_c=n(ks[11], (H, L)), b_bio_c=jnp.zeros((1, L), jnp.float32),
    )


def pack_params(p, num_heads):
    """Stack QKV / head weights, fold attention scale, pad classifiers."""
    H = p['wq'].shape[0]
    L = p['w_bio_c'].shape[1]
    DH = H // num_heads
    scale = 1.0 / float(DH) ** 0.5
    bf = lambda a: a.astype(jnp.bfloat16)
    zeros_hl = jnp.zeros((H, L), jnp.float32)
    return dict(
        word_emb=p['word_emb'], pos_emb=p['pos_emb'],
        ln_e_g=p['ln_e_g'], ln_e_b=p['ln_e_b'],
        # 1/sqrt(DH) folded into Q projection (weight and bias).
        wqkv=bf(jnp.concatenate([p['wq'] * scale, p['wk'], p['wv']], axis=1)),
        bqkv=jnp.concatenate([p['bq'] * scale, p['bk'], p['bv']], axis=1),
        wo=bf(p['wo']), bo=p['bo'],
        ln1_g=p['ln1_g'], ln1_b=p['ln1_b'],
        w1=bf(p['w1']), b1=p['b1'],
        w2=bf(p['w2']), b2=p['b2'],
        ln2_g=p['ln2_g'], ln2_b=p['ln2_b'],
        w_tr=bf(jnp.concatenate([p['w_bio_t'], p['w_gen_t']], axis=1)),
        b_tr=jnp.concatenate([p['b_bio_t'], p['b_gen_t']], axis=1),
        # per-task classifier weights padded to (H, 2L): [bio | 0], [0 | gen]
        w_clsb=bf(jnp.concatenate([p['w_bio_c'], zeros_hl], axis=1)),
        w_clsg=bf(jnp.concatenate([zeros_hl, p['w_gen_c']], axis=1)),
        b_cls=jnp.concatenate([p['b_bio_c'], p['b_gen_c']], axis=1),
    )


if __name__ == "__main__":
    B, S, H, NH, I, V, L = 2, 8, 32, 2, 64, 100, 3

    key = jax.random.PRNGKey(0)
    kp, k1, k2, k3 = jax.random.split(key, 4)
    params = pack_params(init_params(kp, V, S, H, I, L), num_heads=NH)

    input_ids = jax.random.randint(k1, (B, S), 0, V, dtype=jnp.int32)
    attention_mask = jnp.ones((B, S), jnp.int32).at[:, -2:].set(0)
    labels = jax.random.randint(k2, (B, S), 0, L, dtype=jnp.int32)

    # Branch 0: general entities (ids all zero) -> tuple logits + 2 losses.
    ent_general = jnp.zeros((B, S), jnp.int32)
    gb0 = bool(int(ent_general[0, 0]) == 0)   # host-side, outside jit (.item())
    loss0, (bio_l, gen_l), comb0 = forward(
        params, input_ids, attention_mask=attention_mask, labels=labels,
        entity_type_ids=ent_general, general_branch=gb0,
        num_heads=NH, num_labels=L)
    jax.block_until_ready((loss0, bio_l, gen_l, comb0))
    assert bio_l.shape == (B, S, L) and gen_l.shape == (B, S, L)
    assert comb0.shape == (B, S, H)

    # Branch 1: biomedical entities (ids in 1..9) -> summed logits + one loss.
    ent_bio = jax.random.randint(k3, (B, S), 1, 10, dtype=jnp.int32)
    gb1 = bool(int(ent_bio[0, 0]) == 0)
    loss1, logits1, comb1 = forward(
        params, input_ids, attention_mask=attention_mask, labels=labels,
        entity_type_ids=ent_bio, general_branch=gb1,
        num_heads=NH, num_labels=L)
    jax.block_until_ready((loss1, logits1, comb1))
    assert logits1.shape == (B, S, L) and comb1.shape == (B, S, H)

    # labels=None path -> returns just the logits.
    logits_only = forward(params, input_ids, attention_mask=attention_mask,
                          labels=None, entity_type_ids=ent_general,
                          general_branch=gb0, num_heads=NH, num_labels=L)
    jax.block_until_ready(logits_only)

    print("KERNEL_OK")
</pallas_src>

<mosaic_0001>
module attributes {stable_mosaic.version = 11 : i64} {
  func.func @_kernel_general(%arg0: i32, %arg1: memref<1x16x32xf32, #tpu.memory_space<vmem>>, %arg2: memref<1x2x8xf32, #tpu.memory_space<vmem>>, %arg3: memref<1x32xf32, #tpu.memory_space<vmem>>, %arg4: memref<1x32xf32, #tpu.memory_space<vmem>>, %arg5: memref<32x96xbf16, #tpu.memory_space<vmem>>, %arg6: memref<1x96xf32, #tpu.memory_space<vmem>>, %arg7: memref<32x32xbf16, #tpu.memory_space<vmem>>, %arg8: memref<1x32xf32, #tpu.memory_space<vmem>>, %arg9: memref<1x32xf32, #tpu.memory_space<vmem>>, %arg10: memref<1x32xf32, #tpu.memory_space<vmem>>, %arg11: memref<32x64xbf16, #tpu.memory_space<vmem>>, %arg12: memref<1x64xf32, #tpu.memory_space<vmem>>, %arg13: memref<64x32xbf16, #tpu.memory_space<vmem>>, %arg14: memref<1x32xf32, #tpu.memory_space<vmem>>, %arg15: memref<1x32xf32, #tpu.memory_space<vmem>>, %arg16: memref<1x32xf32, #tpu.memory_space<vmem>>, %arg17: memref<32x64xbf16, #tpu.memory_space<vmem>>, %arg18: memref<1x64xf32, #tpu.memory_space<vmem>>, %arg19: memref<32x6xbf16, #tpu.memory_space<vmem>>, %arg20: memref<32x6xbf16, #tpu.memory_space<vmem>>, %arg21: memref<1x6xf32, #tpu.memory_space<vmem>>, %arg22: memref<1x16x32xf32, #tpu.memory_space<vmem>>, %arg23: memref<1x16x6xf32, #tpu.memory_space<vmem>>) attributes {dimension_semantics = [#tpu.dimension_semantics<parallel>], iteration_bounds = array<i64: 1>, scalar_prefetch = 0 : i64, scratch_operands = 0 : i64, tpu.core_type = #tpu.core_type<tc>, window_params = [{transform_indices = @transform_0, window_bounds = array<i64: 1, 16, 32>}, {transform_indices = @transform_1, window_bounds = array<i64: 1, 2, 8>}, {pipeline_mode = #tpu.pipeline_mode<synchronous>, transform_indices = @transform_2, window_bounds = array<i64: 1, 32>}, {pipeline_mode = #tpu.pipeline_mode<synchronous>, transform_indices = @transform_3, window_bounds = array<i64: 1, 32>}, {pipeline_mode = #tpu.pipeline_mode<synchronous>, transform_indices = @transform_4, window_bounds = array<i64: 32, 96>}, {pipeline_mode = #tpu.pipeline_mode<synchronous>, transform_indices = @transform_5, window_bounds = array<i64: 1, 96>}, {pipeline_mode = #tpu.pipeline_mode<synchronous>, transform_indices = @transform_6, window_bounds = array<i64: 32, 32>}, {pipeline_mode = #tpu.pipeline_mode<synchronous>, transform_indices = @transform_7, window_bounds = array<i64: 1, 32>}, {pipeline_mode = #tpu.pipeline_mode<synchronous>, transform_indices = @transform_8, window_bounds = array<i64: 1, 32>}, {pipeline_mode = #tpu.pipeline_mode<synchronous>, transform_indices = @transform_9, window_bounds = array<i64: 1, 32>}, {pipeline_mode = #tpu.pipeline_mode<synchronous>, transform_indices = @transform_10, window_bounds = array<i64: 32, 64>}, {pipeline_mode = #tpu.pipeline_mode<synchronous>, transform_indices = @transform_11, window_bounds = array<i64: 1, 64>}, {pipeline_mode = #tpu.pipeline_mode<synchronous>, transform_indices = @transform_12, window_bounds = array<i64: 64, 32>}, {pipeline_mode = #tpu.pipeline_mode<synchronous>, transform_indices = @transform_13, window_bounds = array<i64: 1, 32>}, {pipeline_mode = #tpu.pipeline_mode<synchronous>, transform_indices = @transform_14, window_bounds = array<i64: 1, 32>}, {pipeline_mode = #tpu.pipeline_mode<synchronous>, transform_indices = @transform_15, window_bounds = array<i64: 1, 32>}, {pipeline_mode = #tpu.pipeline_mode<synchronous>, transform_indices = @transform_16, window_bounds = array<i64: 32, 64>}, {pipeline_mode = #tpu.pipeline_mode<synchronous>, transform_indices = @transform_17, window_bounds = array<i64: 1, 64>}, {pipeline_mode = #tpu.pipeline_mode<synchronous>, transform_indices = @transform_18, window_bounds = array<i64: 32, 6>}, {pipeline_mode = #tpu.pipeline_mode<synchronous>, transform_indices = @transform_19, window_bounds = array<i64: 32, 6>}, {pipeline_mode = #tpu.pipeline_mode<synchronous>, transform_indices = @transform_20, window_bounds = array<i64: 1, 6>}, {transform_indices = @transform_21, window_bounds = array<i64: 1, 16, 32>}, {transform_indices = @transform_22, window_bounds = array<i64: 1, 16, 6>}]} {
    %c0 = arith.constant 0 : index
    %c0_0 = arith.constant 0 : index
    %c0_1 = arith.constant 0 : index
    %0 = vector.load %arg1[%c0, %c0_0, %c0_1] : memref<1x16x32xf32, #tpu.memory_space<vmem>>, vector<1x16x32xf32>
    %1 = vector.shape_cast %0 : vector<1x16x32xf32> to vector<16x32xf32>
    %c0_2 = arith.constant 0 : index
    %c0_3 = arith.constant 0 : index
    %2 = vector.load %arg3[%c0_2, %c0_3] : memref<1x32xf32, #tpu.memory_space<vmem>>, vector<1x32xf32>
    %c0_4 = arith.constant 0 : index
    %c0_5 = arith.constant 0 : index
    %3 = vector.load %arg4[%c0_4, %c0_5] : memref<1x32xf32, #tpu.memory_space<vmem>>, vector<1x32xf32>
    %cst = arith.constant dense<0.000000e+00> : vector<16xf32>
    %4 = vector.multi_reduction <add>, %1, %cst [1] : vector<16x32xf32> to vector<16xf32>
    %5 = vector.shape_cast %4 : vector<16xf32> to vector<16x1xf32>
    %cst_6 = arith.constant 3.200000e+01 : f32
    %6 = vector.broadcast %cst_6 : f32 to vector<16x1xf32>
    %7 = arith.divf %5, %6 : vector<16x1xf32>
    %8 = vector.broadcast %7 : vector<16x1xf32> to vector<16x32xf32>
    %9 = arith.subf %1, %8 : vector<16x32xf32>
    %10 = arith.mulf %9, %9 : vector<16x32xf32>
    %cst_7 = arith.constant dense<0.000000e+00> : vector<16xf32>
    %11 = vector.multi_reduction <add>, %10, %cst_7 [1] : vector<16x32xf32> to vector<16xf32>
    %12 = vector.shape_cast %11 : vector<16xf32> to vector<16x1xf32>
    %cst_8 = arith.constant 3.200000e+01 : f32
    %13 = vector.broadcast %cst_8 : f32 to vector<16x1xf32>
    %14 = arith.divf %12, %13 : vector<16x1xf32>
    %15 = vector.broadcast %7 : vector<16x1xf32> to vector<16x32xf32>
    %16 = arith.subf %1, %15 : vector<16x32xf32>
    %cst_9 = arith.constant 9.99999974E-6 : f32
    %17 = vector.broadcast %cst_9 : f32 to vector<16x1xf32>
    %18 = arith.addf %14, %17 : vector<16x1xf32>
    %19 = math.rsqrt %18 : vector<16x1xf32>
    %20 = vector.broadcast %19 : vector<16x1xf32> to vector<16x32xf32>
    %21 = arith.mulf %16, %20 : vector<16x32xf32>
    %22 = vector.broadcast %2 : vector<1x32xf32> to vector<16x32xf32>
    %23 = arith.mulf %21, %22 : vector<16x32xf32>
    %24 = vector.broadcast %3 : vector<1x32xf32> to vector<16x32xf32>
    %25 = arith.addf %23, %24 : vector<16x32xf32>
    %26 = arith.truncf %25 : vector<16x32xf32> to vector<16x32xbf16>
    %c0_10 = arith.constant 0 : index
    %c0_11 = arith.constant 0 : index
    %27 = vector.load %arg5[%c0_10, %c0_11] : memref<32x96xbf16, #tpu.memory_space<vmem>>, vector<32x96xbf16>
    %cst_12 = arith.constant dense<0.000000e+00> : vector<16x96xf32>
    %28 = tpu.matmul %26, %27, %cst_12 {dimension_numbers = #tpu.dot_dimension_numbers<[1], [0], [0], [1], [0, 0, 1, 1], [], []>} : vector<16x32xbf16>, vector<32x96xbf16>, vector<16x96xf32> -> vector<16x96xf32>
    %c0_13 = arith.constant 0 : index
    %c0_14 = arith.constant 0 : index
    %29 = vector.load %arg6[%c0_13, %c0_14] : memref<1x96xf32, #tpu.memory_space<vmem>>, vector<1x96xf32>
    %30 = vector.broadcast %29 : vector<1x96xf32> to vector<16x96xf32>
    %31 = arith.addf %28, %30 : vector<16x96xf32>
    %c0_15 = arith.constant 0 : index
    %c0_16 = arith.constant 0 : index
    %c0_17 = arith.constant 0 : index
    %32 = vector.load %arg2[%c0_15, %c0_16, %c0_17] : memref<1x2x8xf32, #tpu.memory_space<vmem>>, vector<1x2x8xf32>
    %33 = vector.shape_cast %32 : vector<1x2x8xf32> to vector<2x8xf32>
    %34 = vector.extract_strided_slice %33 {offsets = [0, 0], sizes = [1, 8], strides = [1, 1]} : vector<2x8xf32> to vector<1x8xf32>
    %35 = vector.extract_strided_slice %31 {offsets = [0, 0], sizes = [8, 16], strides = [1, 1]} : vector<16x96xf32> to vector<8x16xf32>
    %36 = vector.extract_strided_slice %31 {offsets = [0, 32], sizes = [8, 16], strides = [1, 1]} : vector<16x96xf32> to vector<8x16xf32>
    %37 = vector.extract_strided_slice %31 {offsets = [0, 64], sizes = [8, 16], strides = [1, 1]} : vector<16x96xf32> to vector<8x16xf32>
    %38 = arith.truncf %35 : vector<8x16xf32> to vector<8x16xbf16>
    %39 = arith.truncf %36 : vector<8x16xf32> to vector<8x16xbf16>
    "tpu.trace_start"() <{level = 10 : i32, message = "qd,kd->qk"}> : () -> ()
    %cst_18 = arith.constant dense<0.000000e+00> : vector<8x8xf32>
    %40 = tpu.matmul %38, %39, %cst_18 {dimension_numbers = #tpu.dot_dimension_numbers<[1], [1], [0], [0], [0, 0, 1, 0], [], []>} : vector<8x16xbf16>, vector<8x16xbf16>, vector<8x8xf32> -> vector<8x8xf32>
    "tpu.trace_stop"() : () -> ()
    %41 = vector.broadcast %34 : vector<1x8xf32> to vector<8x8xf32>
    %42 = arith.addf %40, %41 : vector<8x8xf32>
    %cst_19 = arith.constant dense<0xFF800000> : vector<8xf32>
    %43 = vector.multi_reduction <maximumf>, %42, %cst_19 [1] : vector<8x8xf32> to vector<8xf32>
    %44 = vector.shape_cast %43 : vector<8xf32> to vector<8x1xf32>
    %45 = vector.broadcast %44 : vector<8x1xf32> to vector<8x8xf32>
    %46 = arith.subf %42, %45 : vector<8x8xf32>
    %47 = math.exp %46 : vector<8x8xf32>
    %cst_20 = arith.constant dense<0.000000e+00> : vector<8xf32>
    %48 = vector.multi_reduction <add>, %47, %cst_20 [1] : vector<8x8xf32> to vector<8xf32>
    %49 = vector.shape_cast %48 : vector<8xf32> to vector<8x1xf32>
    %50 = tpu.reciprocal %49 {approx = true} : vector<8x1xf32> -> vector<8x1xf32>
    %51 = vector.broadcast %50 : vector<8x1xf32> to vector<8x8xf32>
    %52 = arith.mulf %47, %51 : vector<8x8xf32>
    %53 = arith.truncf %52 : vector<8x8xf32> to vector<8x8xbf16>
    %54 = arith.truncf %37 : vector<8x16xf32> to vector<8x16xbf16>
    %cst_21 = arith.constant dense<0.000000e+00> : vector<8x16xf32>
    %55 = tpu.matmul %53, %54, %cst_21 {dimension_numbers = #tpu.dot_dimension_numbers<[1], [0], [0], [1], [0, 0, 1, 1], [], []>} : vector<8x8xbf16>, vector<8x16xbf16>, vector<8x16xf32> -> vector<8x16xf32>
    %56 = vector.extract_strided_slice %31 {offsets = [0, 16], sizes = [8, 16], strides = [1, 1]} : vector<16x96xf32> to vector<8x16xf32>
    %57 = vector.extract_strided_slice %31 {offsets = [0, 48], sizes = [8, 16], strides = [1, 1]} : vector<16x96xf32> to vector<8x16xf32>
    %58 = vector.extract_strided_slice %31 {offsets = [0, 80], sizes = [8, 16], strides = [1, 1]} : vector<16x96xf32> to vector<8x16xf32>
    %59 = arith.truncf %56 : vector<8x16xf32> to vector<8x16xbf16>
    %60 = arith.truncf %57 : vector<8x16xf32> to vector<8x16xbf16>
    "tpu.trace_start"() <{level = 10 : i32, message = "qd,kd->qk"}> : () -> ()
    %cst_22 = arith.constant dense<0.000000e+00> : vector<8x8xf32>
    %61 = tpu.matmul %59, %60, %cst_22 {dimension_numbers = #tpu.dot_dimension_numbers<[1], [1], [0], [0], [0, 0, 1, 0], [], []>} : vector<8x16xbf16>, vector<8x16xbf16>, vector<8x8xf32> -> vector<8x8xf32>
    "tpu.trace_stop"() : () -> ()
    %62 = vector.broadcast %34 : vector<1x8xf32> to vector<8x8xf32>
    %63 = arith.addf %61, %62 : vector<8x8xf32>
    %cst_23 = arith.constant dense<0xFF800000> : vector<8xf32>
    %64 = vector.multi_reduction <maximumf>, %63, %cst_23 [1] : vector<8x8xf32> to vector<8xf32>
    %65 = vector.shape_cast %64 : vector<8xf32> to vector<8x1xf32>
    %66 = vector.broadcast %65 : vector<8x1xf32> to vector<8x8xf32>
    %67 = arith.subf %63, %66 : vector<8x8xf32>
    %68 = math.exp %67 : vector<8x8xf32>
    %cst_24 = arith.constant dense<0.000000e+00> : vector<8xf32>
    %69 = vector.multi_reduction <add>, %68, %cst_24 [1] : vector<8x8xf32> to vector<8xf32>
    %70 = vector.shape_cast %69 : vector<8xf32> to vector<8x1xf32>
    %71 = tpu.reciprocal %70 {approx = true} : vector<8x1xf32> -> vector<8x1xf32>
    %72 = vector.broadcast %71 : vector<8x1xf32> to vector<8x8xf32>
    %73 = arith.mulf %68, %72 : vector<8x8xf32>
    %74 = arith.truncf %73 : vector<8x8xf32> to vector<8x8xbf16>
    %75 = arith.truncf %58 : vector<8x16xf32> to vector<8x16xbf16>
    %cst_25 = arith.constant dense<0.000000e+00> : vector<8x16xf32>
    %76 = tpu.matmul %74, %75, %cst_25 {dimension_numbers = #tpu.dot_dimension_numbers<[1], [0], [0], [1], [0, 0, 1, 1], [], []>} : vector<8x8xbf16>, vector<8x16xbf16>, vector<8x16xf32> -> vector<8x16xf32>
    %77 = tpu.concatenate %55, %76 in 1 : vector<8x16xf32>, vector<8x16xf32> -> vector<8x32xf32>
    %78 = vector.extract_strided_slice %33 {offsets = [1, 0], sizes = [1, 8], strides = [1, 1]} : vector<2x8xf32> to vector<1x8xf32>
    %79 = vector.extract_strided_slice %31 {offsets = [8, 0], sizes = [8, 16], strides = [1, 1]} : vector<16x96xf32> to vector<8x16xf32>
    %80 = vector.extract_strided_slice %31 {offsets = [8, 32], sizes = [8, 16], strides = [1, 1]} : vector<16x96xf32> to vector<8x16xf32>
    %81 = vector.extract_strided_slice %31 {offsets = [8, 64], sizes = [8, 16], strides = [1, 1]} : vector<16x96xf32> to vector<8x16xf32>
    %82 = arith.truncf %79 : vector<8x16xf32> to vector<8x16xbf16>
    %83 = arith.truncf %80 : vector<8x16xf32> to vector<8x16xbf16>
    "tpu.trace_start"() <{level = 10 : i32, message = "qd,kd->qk"}> : () -> ()
    %cst_26 = arith.constant dense<0.000000e+00> : vector<8x8xf32>
    %84 = tpu.matmul %82, %83, %cst_26 {dimension_numbers = #tpu.dot_dimension_numbers<[1], [1], [0], [0], [0, 0, 1, 0], [], []>} : vector<8x16xbf16>, vector<8x16xbf16>, vector<8x8xf32> -> vector<8x8xf32>
    "tpu.trace_stop"() : () -> ()
    %85 = vector.broadcast %78 : vector<1x8xf32> to vector<8x8xf32>
    %86 = arith.addf %84, %85 : vector<8x8xf32>
    %cst_27 = arith.constant dense<0xFF800000> : vector<8xf32>
    %87 = vector.multi_reduction <maximumf>, %86, %cst_27 [1] : vector<8x8xf32> to vector<8xf32>
    %88 = vector.shape_cast %87 : vector<8xf32> to vector<8x1xf32>
    %89 = vector.broadcast %88 : vector<8x1xf32> to vector<8x8xf32>
    %90 = arith.subf %86, %89 : vector<8x8xf32>
    %91 = math.exp %90 : vector<8x8xf32>
    %cst_28 = arith.constant dense<0.000000e+00> : vector<8xf32>
    %92 = vector.multi_reduction <add>, %91, %cst_28 [1] : vector<8x8xf32> to vector<8xf32>
    %93 = vector.shape_cast %92 : vector<8xf32> to vector<8x1xf32>
    %94 = tpu.reciprocal %93 {approx = true} : vector<8x1xf32> -> vector<8x1xf32>
    %95 = vector.broadcast %94 : vector<8x1xf32> to vector<8x8xf32>
    %96 = arith.mulf %91, %95 : vector<8x8xf32>
    %97 = arith.truncf %96 : vector<8x8xf32> to vector<8x8xbf16>
    %98 = arith.truncf %81 : vector<8x16xf32> to vector<8x16xbf16>
    %cst_29 = arith.constant dense<0.000000e+00> : vector<8x16xf32>
    %99 = tpu.matmul %97, %98, %cst_29 {dimension_numbers = #tpu.dot_dimension_numbers<[1], [0], [0], [1], [0, 0, 1, 1], [], []>} : vector<8x8xbf16>, vector<8x16xbf16>, vector<8x16xf32> -> vector<8x16xf32>
    %100 = vector.extract_strided_slice %31 {offsets = [8, 16], sizes = [8, 16], strides = [1, 1]} : vector<16x96xf32> to vector<8x16xf32>
    %101 = vector.extract_strided_slice %31 {offsets = [8, 48], sizes = [8, 16], strides = [1, 1]} : vector<16x96xf32> to vector<8x16xf32>
    %102 = vector.extract_strided_slice %31 {offsets = [8, 80], sizes = [8, 16], strides = [1, 1]} : vector<16x96xf32> to vector<8x16xf32>
    %103 = arith.truncf %100 : vector<8x16xf32> to vector<8x16xbf16>
    %104 = arith.truncf %101 : vector<8x16xf32> to vector<8x16xbf16>
    "tpu.trace_start"() <{level = 10 : i32, message = "qd,kd->qk"}> : () -> ()
    %cst_30 = arith.constant dense<0.000000e+00> : vector<8x8xf32>
    %105 = tpu.matmul %103, %104, %cst_30 {dimension_numbers = #tpu.dot_dimension_numbers<[1], [1], [0], [0], [0, 0, 1, 0], [], []>} : vector<8x16xbf16>, vector<8x16xbf16>, vector<8x8xf32> -> vector<8x8xf32>
    "tpu.trace_stop"() : () -> ()
    %106 = vector.broadcast %78 : vector<1x8xf32> to vector<8x8xf32>
    %107 = arith.addf %105, %106 : vector<8x8xf32>
    %cst_31 = arith.constant dense<0xFF800000> : vector<8xf32>
    %108 = vector.multi_reduction <maximumf>, %107, %cst_31 [1] : vector<8x8xf32> to vector<8xf32>
    %109 = vector.shape_cast %108 : vector<8xf32> to vector<8x1xf32>
    %110 = vector.broadcast %109 : vector<8x1xf32> to vector<8x8xf32>
    %111 = arith.subf %107, %110 : vector<8x8xf32>
    %112 = math.exp %111 : vector<8x8xf32>
    %cst_32 = arith.constant dense<0.000000e+00> : vector<8xf32>
    %113 = vector.multi_reduction <add>, %112, %cst_32 [1] : vector<8x8xf32> to vector<8xf32>
    %114 = vector.shape_cast %113 : vector<8xf32> to vector<8x1xf32>
    %115 = tpu.reciprocal %114 {approx = true} : vector<8x1xf32> -> vector<8x1xf32>
    %116 = vector.broadcast %115 : vector<8x1xf32> to vector<8x8xf32>
    %117 = arith.mulf %112, %116 : vector<8x8xf32>
    %118 = arith.truncf %117 : vector<8x8xf32> to vector<8x8xbf16>
    %119 = arith.truncf %102 : vector<8x16xf32> to vector<8x16xbf16>
    %cst_33 = arith.constant dense<0.000000e+00> : vector<8x16xf32>
    %120 = tpu.matmul %118, %119, %cst_33 {dimension_numbers = #tpu.dot_dimension_numbers<[1], [0], [0], [1], [0, 0, 1, 1], [], []>} : vector<8x8xbf16>, vector<8x16xbf16>, vector<8x16xf32> -> vector<8x16xf32>
    %121 = tpu.concatenate %99, %120 in 1 : vector<8x16xf32>, vector<8x16xf32> -> vector<8x32xf32>
    %122 = tpu.concatenate %77, %121 in 0 : vector<8x32xf32>, vector<8x32xf32> -> vector<16x32xf32>
    %123 = arith.truncf %122 : vector<16x32xf32> to vector<16x32xbf16>
    %c0_34 = arith.constant 0 : index
    %c0_35 = arith.constant 0 : index
    %124 = vector.load %arg7[%c0_34, %c0_35] : memref<32x32xbf16, #tpu.memory_space<vmem>>, vector<32x32xbf16>
    %cst_36 = arith.constant dense<0.000000e+00> : vector<16x32xf32>
    %125 = tpu.matmul %123, %124, %cst_36 {dimension_numbers = #tpu.dot_dimension_numbers<[1], [0], [0], [1], [0, 0, 1, 1], [], []>} : vector<16x32xbf16>, vector<32x32xbf16>, vector<16x32xf32> -> vector<16x32xf32>
    %c0_37 = arith.constant 0 : index
    %c0_38 = arith.constant 0 : index
    %126 = vector.load %arg8[%c0_37, %c0_38] : memref<1x32xf32, #tpu.memory_space<vmem>>, vector<1x32xf32>
    %127 = vector.broadcast %126 : vector<1x32xf32> to vector<16x32xf32>
    %128 = arith.addf %125, %127 : vector<16x32xf32>
    %129 = arith.addf %25, %128 : vector<16x32xf32>
    %c0_39 = arith.constant 0 : index
    %c0_40 = arith.constant 0 : index
    %130 = vector.load %arg9[%c0_39, %c0_40] : memref<1x32xf32, #tpu.memory_space<vmem>>, vector<1x32xf32>
    %c0_41 = arith.constant 0 : index
    %c0_42 = arith.constant 0 : index
    %131 = vector.load %arg10[%c0_41, %c0_42] : memref<1x32xf32, #tpu.memory_space<vmem>>, vector<1x32xf32>
    %cst_43 = arith.constant dense<0.000000e+00> : vector<16xf32>
    %132 = vector.multi_reduction <add>, %129, %cst_43 [1] : vector<16x32xf32> to vector<16xf32>
    %133 = vector.shape_cast %132 : vector<16xf32> to vector<16x1xf32>
    %cst_44 = arith.constant 3.200000e+01 : f32
    %134 = vector.broadcast %cst_44 : f32 to vector<16x1xf32>
    %135 = arith.divf %133, %134 : vector<16x1xf32>
    %136 = vector.broadcast %135 : vector<16x1xf32> to vector<16x32xf32>
    %137 = arith.subf %129, %136 : vector<16x32xf32>
    %138 = arith.mulf %137, %137 : vector<16x32xf32>
    %cst_45 = arith.constant dense<0.000000e+00> : vector<16xf32>
    %139 = vector.multi_reduction <add>, %138, %cst_45 [1] : vector<16x32xf32> to vector<16xf32>
    %140 = vector.shape_cast %139 : vector<16xf32> to vector<16x1xf32>
    %cst_46 = arith.constant 3.200000e+01 : f32
    %141 = vector.broadcast %cst_46 : f32 to vector<16x1xf32>
    %142 = arith.divf %140, %141 : vector<16x1xf32>
    %143 = vector.broadcast %135 : vector<16x1xf32> to vector<16x32xf32>
    %144 = arith.subf %129, %143 : vector<16x32xf32>
    %cst_47 = arith.constant 9.99999974E-6 : f32
    %145 = vector.broadcast %cst_47 : f32 to vector<16x1xf32>
    %146 = arith.addf %142, %145 : vector<16x1xf32>
    %147 = math.rsqrt %146 : vector<16x1xf32>
    %148 = vector.broadcast %147 : vector<16x1xf32> to vector<16x32xf32>
    %149 = arith.mulf %144, %148 : vector<16x32xf32>
    %150 = vector.broadcast %130 : vector<1x32xf32> to vector<16x32xf32>
    %151 = arith.mulf %149, %150 : vector<16x32xf32>
    %152 = vector.broadcast %131 : vector<1x32xf32> to vector<16x32xf32>
    %153 = arith.addf %151, %152 : vector<16x32xf32>
    %154 = arith.truncf %153 : vector<16x32xf32> to vector<16x32xbf16>
    %c0_48 = arith.constant 0 : index
    %c0_49 = arith.constant 0 : index
    %155 = vector.load %arg11[%c0_48, %c0_49] : memref<32x64xbf16, #tpu.memory_space<vmem>>, vector<32x64xbf16>
    %cst_50 = arith.constant dense<0.000000e+00> : vector<16x64xf32>
    %156 = tpu.matmul %154, %155, %cst_50 {dimension_numbers = #tpu.dot_dimension_numbers<[1], [0], [0], [1], [0, 0, 1, 1], [], []>} : vector<16x32xbf16>, vector<32x64xbf16>, vector<16x64xf32> -> vector<16x64xf32>
    %c0_51 = arith.constant 0 : index
    %c0_52 = arith.constant 0 : index
    %157 = vector.load %arg12[%c0_51, %c0_52] : memref<1x64xf32, #tpu.memory_space<vmem>>, vector<1x64xf32>
    %158 = vector.broadcast %157 : vector<1x64xf32> to vector<16x64xf32>
    %159 = arith.addf %156, %158 : vector<16x64xf32>
    %160 = arith.mulf %159, %159 : vector<16x64xf32>
    %161 = arith.mulf %159, %160 : vector<16x64xf32>
    %cst_53 = arith.constant 4.471500e-02 : f32
    %162 = vector.broadcast %cst_53 : f32 to vector<16x64xf32>
    %163 = arith.mulf %162, %161 : vector<16x64xf32>
    %164 = arith.addf %159, %163 : vector<16x64xf32>
    %cst_54 = arith.constant 0.797884583 : f32
    %165 = vector.broadcast %cst_54 : f32 to vector<16x64xf32>
    %166 = arith.mulf %165, %164 : vector<16x64xf32>
    %167 = math.tanh %166 : vector<16x64xf32>
    %cst_55 = arith.constant 1.000000e+00 : f32
    %168 = vector.broadcast %cst_55 : f32 to vector<16x64xf32>
    %169 = arith.addf %168, %167 : vector<16x64xf32>
    %cst_56 = arith.constant 5.000000e-01 : f32
    %170 = vector.broadcast %cst_56 : f32 to vector<16x64xf32>
    %171 = arith.mulf %170, %169 : vector<16x64xf32>
    %172 = arith.mulf %159, %171 : vector<16x64xf32>
    %173 = arith.truncf %172 : vector<16x64xf32> to vector<16x64xbf16>
    %c0_57 = arith.constant 0 : index
    %c0_58 = arith.constant 0 : index
    %174 = vector.load %arg13[%c0_57, %c0_58] : memref<64x32xbf16, #tpu.memory_space<vmem>>, vector<64x32xbf16>
    %cst_59 = arith.constant dense<0.000000e+00> : vector<16x32xf32>
    %175 = tpu.matmul %173, %174, %cst_59 {dimension_numbers = #tpu.dot_dimension_numbers<[1], [0], [0], [1], [0, 0, 1, 1], [], []>} : vector<16x64xbf16>, vector<64x32xbf16>, vector<16x32xf32> -> vector<16x32xf32>
    %c0_60 = arith.constant 0 : index
    %c0_61 = arith.constant 0 : index
    %176 = vector.load %arg14[%c0_60, %c0_61] : memref<1x32xf32, #tpu.memory_space<vmem>>, vector<1x32xf32>
    %177 = vector.broadcast %176 : vector<1x32xf32> to vector<16x32xf32>
    %178 = arith.addf %175, %177 : vector<16x32xf32>
    %179 = arith.addf %153, %178 : vector<16x32xf32>
    %c0_62 = arith.constant 0 : index
    %c0_63 = arith.constant 0 : index
    %180 = vector.load %arg15[%c0_62, %c0_63] : memref<1x32xf32, #tpu.memory_space<vmem>>, vector<1x32xf32>
    %c0_64 = arith.constant 0 : index
    %c0_65 = arith.constant 0 : index
    %181 = vector.load %arg16[%c0_64, %c0_65] : memref<1x32xf32, #tpu.memory_space<vmem>>, vector<1x32xf32>
    %cst_66 = arith.constant dense<0.000000e+00> : vector<16xf32>
    %182 = vector.multi_reduction <add>, %179, %cst_66 [1] : vector<16x32xf32> to vector<16xf32>
    %183 = vector.shape_cast %182 : vector<16xf32> to vector<16x1xf32>
    %cst_67 = arith.constant 3.200000e+01 : f32
    %184 = vector.broadcast %cst_67 : f32 to vector<16x1xf32>
    %185 = arith.divf %183, %184 : vector<16x1xf32>
    %186 = vector.broadcast %185 : vector<16x1xf32> to vector<16x32xf32>
    %187 = arith.subf %179, %186 : vector<16x32xf32>
    %188 = arith.mulf %187, %187 : vector<16x32xf32>
    %cst_68 = arith.constant dense<0.000000e+00> : vector<16xf32>
    %189 = vector.multi_reduction <add>, %188, %cst_68 [1] : vector<16x32xf32> to vector<16xf32>
    %190 = vector.shape_cast %189 : vector<16xf32> to vector<16x1xf32>
    %cst_69 = arith.constant 3.200000e+01 : f32
    %191 = vector.broadcast %cst_69 : f32 to vector<16x1xf32>
    %192 = arith.divf %190, %191 : vector<16x1xf32>
    %193 = vector.broadcast %185 : vector<16x1xf32> to vector<16x32xf32>
    %194 = arith.subf %179, %193 : vector<16x32xf32>
    %cst_70 = arith.constant 9.99999974E-6 : f32
    %195 = vector.broadcast %cst_70 : f32 to vector<16x1xf32>
    %196 = arith.addf %192, %195 : vector<16x1xf32>
    %197 = math.rsqrt %196 : vector<16x1xf32>
    %198 = vector.broadcast %197 : vector<16x1xf32> to vector<16x32xf32>
    %199 = arith.mulf %194, %198 : vector<16x32xf32>
    %200 = vector.broadcast %180 : vector<1x32xf32> to vector<16x32xf32>
    %201 = arith.mulf %199, %200 : vector<16x32xf32>
    %202 = vector.broadcast %181 : vector<1x32xf32> to vector<16x32xf32>
    %203 = arith.addf %201, %202 : vector<16x32xf32>
    %204 = arith.truncf %203 : vector<16x32xf32> to vector<16x32xbf16>
    %c0_71 = arith.constant 0 : index
    %c0_72 = arith.constant 0 : index
    %205 = vector.load %arg17[%c0_71, %c0_72] : memref<32x64xbf16, #tpu.memory_space<vmem>>, vector<32x64xbf16>
    %cst_73 = arith.constant dense<0.000000e+00> : vector<16x64xf32>
    %206 = tpu.matmul %204, %205, %cst_73 {dimension_numbers = #tpu.dot_dimension_numbers<[1], [0], [0], [1], [0, 0, 1, 1], [], []>} : vector<16x32xbf16>, vector<32x64xbf16>, vector<16x64xf32> -> vector<16x64xf32>
    %207 = vector.extract_strided_slice %206 {offsets = [0, 0], sizes = [16, 32], strides = [1, 1]} : vector<16x64xf32> to vector<16x32xf32>
    %208 = vector.extract_strided_slice %206 {offsets = [0, 32], sizes = [16, 32], strides = [1, 1]} : vector<16x64xf32> to vector<16x32xf32>
    %c0_74 = arith.constant 0 : index
    %c0_75 = arith.constant 0 : index
    %209 = vector.load %arg18[%c0_74, %c0_75] : memref<1x64xf32, #tpu.memory_space<vmem>>, vector<1x32xf32>
    %210 = vector.broadcast %209 : vector<1x32xf32> to vector<16x32xf32>
    %211 = arith.addf %207, %210 : vector<16x32xf32>
    %cst_76 = arith.constant 0.000000e+00 : f32
    %212 = vector.broadcast %cst_76 : f32 to vector<16x32xf32>
    %213 = arith.maximumf %211, %212 : vector<16x32xf32>
    %c0_77 = arith.constant 0 : index
    %c32 = arith.constant 32 : index
    %214 = vector.load %arg18[%c0_77, %c32] : memref<1x64xf32, #tpu.memory_space<vmem>>, vector<1x32xf32>
    %215 = vector.broadcast %214 : vector<1x32xf32> to vector<16x32xf32>
    %216 = arith.addf %208, %215 : vector<16x32xf32>
    %cst_78 = arith.constant 0.000000e+00 : f32
    %217 = vector.broadcast %cst_78 : f32 to vector<16x32xf32>
    %218 = arith.maximumf %216, %217 : vector<16x32xf32>
    %219 = arith.addf %213, %218 : vector<16x32xf32>
    %c0_79 = arith.constant 0 : index
    %c0_80 = arith.constant 0 : index
    %c0_81 = arith.constant 0 : index
    %220 = vector.load %arg22[%c0_79, %c0_80, %c0_81] : memref<1x16x32xf32, #tpu.memory_space<vmem>>, vector<1x16x32xf32>
    %221 = vector.shape_cast %220 : vector<1x16x32xf32> to vector<16x32xf32>
    %222 = vector.shape_cast %219 : vector<16x32xf32> to vector<1x16x32xf32>
    tpu.vector_store %arg22[%c0_79, %c0_80, %c0_81], %222 {strides = array<i32>} : memref<1x16x32xf32, #tpu.memory_space<vmem>>, vector<1x16x32xf32>,
    %223 = arith.truncf %213 : vector<16x32xf32> to vector<16x32xbf16>
    %c0_82 = arith.constant 0 : index
    %c0_83 = arith.constant 0 : index
    %224 = vector.load %arg19[%c0_82, %c0_83] : memref<32x6xbf16, #tpu.memory_space<vmem>>, vector<32x6xbf16>
    %cst_84 = arith.constant dense<0.000000e+00> : vector<16x6xf32>
    %225 = tpu.matmul %223, %224, %cst_84 {dimension_numbers = #tpu.dot_dimension_numbers<[1], [0], [0], [1], [0, 0, 1, 1], [], []>} : vector<16x32xbf16>, vector<32x6xbf16>, vector<16x6xf32> -> vector<16x6xf32>
    %226 = arith.truncf %218 : vector<16x32xf32> to vector<16x32xbf16>
    %c0_85 = arith.constant 0 : index
    %c0_86 = arith.constant 0 : index
    %227 = vector.load %arg20[%c0_85, %c0_86] : memref<32x6xbf16, #tpu.memory_space<vmem>>, vector<32x6xbf16>
    %cst_87 = arith.constant dense<0.000000e+00> : vector<16x6xf32>
    %228 = tpu.matmul %226, %227, %cst_87 {dimension_numbers = #tpu.dot_dimension_numbers<[1], [0], [0], [1], [0, 0, 1, 1], [], []>} : vector<16x32xbf16>, vector<32x6xbf16>, vector<16x6xf32> -> vector<16x6xf32>
    %229 = arith.addf %225, %228 : vector<16x6xf32>
    %c0_88 = arith.constant 0 : index
    %c0_89 = arith.constant 0 : index
    %230 = vector.load %arg21[%c0_88, %c0_89] : memref<1x6xf32, #tpu.memory_space<vmem>>, vector<1x6xf32>
    %231 = vector.broadcast %230 : vector<1x6xf32> to vector<16x6xf32>
    %232 = arith.addf %229, %231 : vector<16x6xf32>
    %c0_90 = arith.constant 0 : index
    %c0_91 = arith.constant 0 : index
    %c0_92 = arith.constant 0 : index
    %233 = vector.load %arg23[%c0_90, %c0_91, %c0_92] : memref<1x16x6xf32, #tpu.memory_space<vmem>>, vector<1x16x6xf32>
    %234 = vector.shape_cast %233 : vector<1x16x6xf32> to vector<16x6xf32>
    %235 = vector.shape_cast %232 : vector<16x6xf32> to vector<1x16x6xf32>
    tpu.vector_store %arg23[%c0_90, %c0_91, %c0_92], %235 {strides = array<i32>} : memref<1x16x6xf32, #tpu.memory_space<vmem>>, vector<1x16x6xf32>,
    return
  }
  func.func @transform_0(%arg0: i32) -> (i32, i32, i32) {
    %c0_i32 = arith.constant 0 : i32
    %c0_i32_0 = arith.constant 0 : i32
    %c0_i32_1 = arith.constant 0 : i32
    return %arg0, %c0_i32, %c0_i32_0 : i32, i32, i32
  }
  func.func @transform_1(%arg0: i32) -> (i32, i32, i32) {
    %c0_i32 = arith.constant 0 : i32
    %c0_i32_0 = arith.constant 0 : i32
    %c0_i32_1 = arith.constant 0 : i32
    return %arg0, %c0_i32, %c0_i32_0 : i32, i32, i32
  }
  func.func @transform_2(%arg0: i32) -> (i32, i32) {
    %c0_i32 = arith.constant 0 : i32
    %c0_i32_0 = arith.constant 0 : i32
    %c0_i32_1 = arith.constant 0 : i32
    return %c0_i32, %c0_i32_0 : i32, i32
  }
  func.func @transform_3(%arg0: i32) -> (i32, i32) {
    %c0_i32 = arith.constant 0 : i32
    %c0_i32_0 = arith.constant 0 : i32
    %c0_i32_1 = arith.constant 0 : i32
    return %c0_i32, %c0_i32_0 : i32, i32
  }
  func.func @transform_4(%arg0: i32) -> (i32, i32) {
    %c0_i32 = arith.constant 0 : i32
    %c0_i32_0 = arith.constant 0 : i32
    %c0_i32_1 = arith.constant 0 : i32
    return %c0_i32, %c0_i32_0 : i32, i32
  }
  func.func @transform_5(%arg0: i32) -> (i32, i32) {
    %c0_i32 = arith.constant 0 : i32
    %c0_i32_0 = arith.constant 0 : i32
    %c0_i32_1 = arith.constant 0 : i32
    return %c0_i32, %c0_i32_0 : i32, i32
  }
  func.func @transform_6(%arg0: i32) -> (i32, i32) {
    %c0_i32 = arith.constant 0 : i32
    %c0_i32_0 = arith.constant 0 : i32
    %c0_i32_1 = arith.constant 0 : i32
    return %c0_i32, %c0_i32_0 : i32, i32
  }
  func.func @transform_7(%arg0: i32) -> (i32, i32) {
    %c0_i32 = arith.constant 0 : i32
    %c0_i32_0 = arith.constant 0 : i32
    %c0_i32_1 = arith.constant 0 : i32
    return %c0_i32, %c0_i32_0 : i32, i32
  }
  func.func @transform_8(%arg0: i32) -> (i32, i32) {
    %c0_i32 = arith.constant 0 : i32
    %c0_i32_0 = arith.constant 0 : i32
    %c0_i32_1 = arith.constant 0 : i32
    return %c0_i32, %c0_i32_0 : i32, i32
  }
  func.func @transform_9(%arg0: i32) -> (i32, i32) {
    %c0_i32 = arith.constant 0 : i32
    %c0_i32_0 = arith.constant 0 : i32
    %c0_i32_1 = arith.constant 0 : i32
    return %c0_i32, %c0_i32_0 : i32, i32
  }
  func.func @transform_10(%arg0: i32) -> (i32, i32) {
    %c0_i32 = arith.constant 0 : i32
    %c0_i32_0 = arith.constant 0 : i32
    %c0_i32_1 = arith.constant 0 : i32
    return %c0_i32, %c0_i32_0 : i32, i32
  }
  func.func @transform_11(%arg0: i32) -> (i32, i32) {
    %c0_i32 = arith.constant 0 : i32
    %c0_i32_0 = arith.constant 0 : i32
    %c0_i32_1 = arith.constant 0 : i32
    return %c0_i32, %c0_i32_0 : i32, i32
  }
  func.func @transform_12(%arg0: i32) -> (i32, i32) {
    %c0_i32 = arith.constant 0 : i32
    %c0_i32_0 = arith.constant 0 : i32
    %c0_i32_1 = arith.constant 0 : i32
    return %c0_i32, %c0_i32_0 : i32, i32
  }
  func.func @transform_13(%arg0: i32) -> (i32, i32) {
    %c0_i32 = arith.constant 0 : i32
    %c0_i32_0 = arith.constant 0 : i32
    %c0_i32_1 = arith.constant 0 : i32
    return %c0_i32, %c0_i32_0 : i32, i32
  }
  func.func @transform_14(%arg0: i32) -> (i32, i32) {
    %c0_i32 = arith.constant 0 : i32
    %c0_i32_0 = arith.constant 0 : i32
    %c0_i32_1 = arith.constant 0 : i32
    return %c0_i32, %c0_i32_0 : i32, i32
  }
  func.func @transform_15(%arg0: i32) -> (i32, i32) {
    %c0_i32 = arith.constant 0 : i32
    %c0_i32_0 = arith.constant 0 : i32
    %c0_i32_1 = arith.constant 0 : i32
    return %c0_i32, %c0_i32_0 : i32, i32
  }
  func.func @transform_16(%arg0: i32) -> (i32, i32) {
    %c0_i32 = arith.constant 0 : i32
    %c0_i32_0 = arith.constant 0 : i32
    %c0_i32_1 = arith.constant 0 : i32
    return %c0_i32, %c0_i32_0 : i32, i32
  }
  func.func @transform_17(%arg0: i32) -> (i32, i32) {
    %c0_i32 = arith.constant 0 : i32
    %c0_i32_0 = arith.constant 0 : i32
    %c0_i32_1 = arith.constant 0 : i32
    return %c0_i32, %c0_i32_0 : i32, i32
  }
  func.func @transform_18(%arg0: i32) -> (i32, i32) {
    %c0_i32 = arith.constant 0 : i32
    %c0_i32_0 = arith.constant 0 : i32
    %c0_i32_1 = arith.constant 0 : i32
    return %c0_i32, %c0_i32_0 : i32, i32
  }
  func.func @transform_19(%arg0: i32) -> (i32, i32) {
    %c0_i32 = arith.constant 0 : i32
    %c0_i32_0 = arith.constant 0 : i32
    %c0_i32_1 = arith.constant 0 : i32
    return %c0_i32, %c0_i32_0 : i32, i32
  }
  func.func @transform_20(%arg0: i32) -> (i32, i32) {
    %c0_i32 = arith.constant 0 : i32
    %c0_i32_0 = arith.constant 0 : i32
    %c0_i32_1 = arith.constant 0 : i32
    return %c0_i32, %c0_i32_0 : i32, i32
  }
  func.func @transform_21(%arg0: i32) -> (i32, i32, i32) {
    %c0_i32 = arith.constant 0 : i32
    %c0_i32_0 = arith.constant 0 : i32
    %c0_i32_1 = arith.constant 0 : i32
    return %arg0, %c0_i32, %c0_i32_0 : i32, i32, i32
  }
  func.func @transform_22(%arg0: i32) -> (i32, i32, i32) {
    %c0_i32 = arith.constant 0 : i32
    %c0_i32_0 = arith.constant 0 : i32
    %c0_i32_1 = arith.constant 0 : i32
    return %arg0, %c0_i32, %c0_i32_0 : i32, i32, i32
  }
}

</mosaic_0001>

<llo_original>
// kernel: forward.1
$region0: #{forward.1}
  #allocation0 [shape = 'u32[]', space=smem, size = 0x4, offset = 0x4, fixed_abs, tag = 'smem constant byte address 0x4 - core index']
  #allocation1 [shape = 'u32[144,128]{1,0:T(1,128)}', space=vmem, size = 0x12000, scoped, tag = 'internal scratch']
  %s0 = inlined_call_operand.vmem [shape: f32[1,16,32], index: 0, kind: input, shape index: {}]
  %s1 = inlined_call_operand.vmem [shape: f32[1,2,8], index: 1, kind: input, shape index: {}]
  %s2 = inlined_call_operand.vmem [shape: f32[1,32], index: 2, kind: input, shape index: {}]
  %s3 = inlined_call_operand.vmem [shape: f32[1,32], index: 3, kind: input, shape index: {}]
  %s4 = inlined_call_operand.vmem [shape: bf16[32,96], index: 4, kind: input, shape index: {}]
  %s5 = inlined_call_operand.vmem [shape: f32[1,96], index: 5, kind: input, shape index: {}]
  %s6 = inlined_call_operand.vmem [shape: bf16[32,32], index: 6, kind: input, shape index: {}]
  %s7 = inlined_call_operand.vmem [shape: f32[1,32], index: 7, kind: input, shape index: {}]
  %s8 = inlined_call_operand.vmem [shape: f32[1,32], index: 8, kind: input, shape index: {}]
  %s9 = inlined_call_operand.vmem [shape: f32[1,32], index: 9, kind: input, shape index: {}]
  %s10 = inlined_call_operand.vmem [shape: bf16[32,64], index: 10, kind: input, shape index: {}]
  %s11 = inlined_call_operand.vmem [shape: f32[1,64], index: 11, kind: input, shape index: {}]
  %s12 = inlined_call_operand.vmem [shape: bf16[64,32], index: 12, kind: input, shape index: {}]
  %s13 = inlined_call_operand.vmem [shape: f32[1,32], index: 13, kind: input, shape index: {}]
  %s14 = inlined_call_operand.vmem [shape: f32[1,32], index: 14, kind: input, shape index: {}]
  %s15 = inlined_call_operand.vmem [shape: f32[1,32], index: 15, kind: input, shape index: {}]
  %s16 = inlined_call_operand.vmem [shape: bf16[32,64], index: 16, kind: input, shape index: {}]
  %s17 = inlined_call_operand.vmem [shape: f32[1,64], index: 17, kind: input, shape index: {}]
  %s18 = inlined_call_operand.vmem [shape: bf16[32,6], index: 18, kind: input, shape index: {}]
  %s19 = inlined_call_operand.vmem [shape: bf16[32,6], index: 19, kind: input, shape index: {}]
  %s20 = inlined_call_operand.vmem [shape: f32[1,6], index: 20, kind: input, shape index: {}]
  %s21 = inlined_call_operand.hbm [shape: f32[1,16,32], index: 21, kind: output, shape index: {0}]
  %s22 = inlined_call_operand.vmem [shape: f32[1,16,6], index: 22, kind: output, shape index: {1}]
  %23 = xla_tuple %s21, %s22
  %s24 = sld [smem:[#allocation0]]
  $region102: #{forward.1} parent=0
    _
  %s26 = ssub.s32 1, %s24
  %s27 = scalar_select 0, %s26, %s24
  $region1: #{forward.1} parent=0
    #allocation2 [shape = 'u8[8192]{0}', space=vmem, size = 0x2000, scoped, tag = 'output window, operand 0, single buffered']
    #allocation3 [shape = 's32[1]{0}', space=sflag, size = 0x4, scoped, tag = 'scoped memory for forward.1']
    %28 = vsyncpa [#allocation3], 0
    // Predicated region
    $region2: #{forward.1} parent=1 // pred_check
      _
    $region3: #{forward.1} parent=1 // pred_check_branch
      %30 = sbr.rel (0) target = $region5
    $region4: #{forward.1} parent=1 // pred_region
      _
    $region5: #{forward.1} parent=1 // pred_fallthru
      _
    // Predicated region
    $region6: #{forward.1} parent=1 // pred_check
      _
    $region7: #{forward.1} parent=1 // pred_check_branch
      %32 = sbr.rel (0) target = $region9
    $region8: #{forward.1} parent=1 // pred_region
      _
    $region9: #{forward.1} parent=1 // pred_fallthru
      _
    // Predicated region
    $region10: #{forward.1} parent=1 // pred_check
      _
    $region11: #{forward.1} parent=1 // pred_check_branch
      %34 = sbr.rel (0) target = $region13
    $region12: #{forward.1} parent=1 // pred_region
      _
    $region13: #{forward.1} parent=1 // pred_fallthru
      _
    // Predicated region
    $region14: #{forward.1} parent=1 // pred_check
      _
    $region15: #{forward.1} parent=1 // pred_check_branch
      %36 = sbr.rel (0) target = $region17
    $region16: #{forward.1} parent=1 // pred_region
      _
    $region17: #{forward.1} parent=1 // pred_fallthru
      _
    // Predicated region
    $region18: #{forward.1} parent=1 // pred_check
      _
    $region19: #{forward.1} parent=1 // pred_check_branch
      %38 = sbr.rel (0) target = $region21
    $region20: #{forward.1} parent=1 // pred_region
      _
    $region21: #{forward.1} parent=1 // pred_fallthru
      _
    // Predicated region
    $region22: #{forward.1} parent=1 // pred_check
      _
    $region23: #{forward.1} parent=1 // pred_check_branch
      %40 = sbr.rel (0) target = $region25
    $region24: #{forward.1} parent=1 // pred_region
      _
    $region25: #{forward.1} parent=1 // pred_fallthru
      _
    // Predicated region
    $region26: #{forward.1} parent=1 // pred_check
      _
    $region27: #{forward.1} parent=1 // pred_check_branch
      %42 = sbr.rel (0) target = $region29
    $region28: #{forward.1} parent=1 // pred_region
      _
    $region29: #{forward.1} parent=1 // pred_fallthru
      _
    // Predicated region
    $region30: #{forward.1} parent=1 // pred_check
      _
    $region31: #{forward.1} parent=1 // pred_check_branch
      %44 = sbr.rel (0) target = $region33
    $region32: #{forward.1} parent=1 // pred_region
      _
    $region33: #{forward.1} parent=1 // pred_fallthru
      _
    // Predicated region
    $region34: #{forward.1} parent=1 // pred_check
      _
    $region35: #{forward.1} parent=1 // pred_check_branch
      %46 = sbr.rel (0) target = $region37
    $region36: #{forward.1} parent=1 // pred_region
      _
    $region37: #{forward.1} parent=1 // pred_fallthru
      _
    // Predicated region
    $region38: #{forward.1} parent=1 // pred_check
      _
    $region39: #{forward.1} parent=1 // pred_check_branch
      %48 = sbr.rel (0) target = $region41
    $region40: #{forward.1} parent=1 // pred_region
      _
    $region41: #{forward.1} parent=1 // pred_fallthru
      _
    // Predicated region
    $region42: #{forward.1} parent=1 // pred_check
      _
    $region43: #{forward.1} parent=1 // pred_check_branch
      %50 = sbr.rel (0) target = $region45
    $region44: #{forward.1} parent=1 // pred_region
      _
    $region45: #{forward.1} parent=1 // pred_fallthru
      _
    // Predicated region
    $region46: #{forward.1} parent=1 // pred_check
      _
    $region47: #{forward.1} parent=1 // pred_check_branch
      %52 = sbr.rel (0) target = $region49
    $region48: #{forward.1} parent=1 // pred_region
      _
    $region49: #{forward.1} parent=1 // pred_fallthru
      _
    // Predicated region
    $region50: #{forward.1} parent=1 // pred_check
      _
    $region51: #{forward.1} parent=1 // pred_check_branch
      %54 = sbr.rel (0) target = $region53
    $region52: #{forward.1} parent=1 // pred_region
      _
    $region53: #{forward.1} parent=1 // pred_fallthru
      _
    // Predicated region
    $region54: #{forward.1} parent=1 // pred_check
      _
    $region55: #{forward.1} parent=1 // pred_check_branch
      %56 = sbr.rel (0) target = $region57
    $region56: #{forward.1} parent=1 // pred_region
      _
    $region57: #{forward.1} parent=1 // pred_fallthru
      _
    // Predicated region
    $region58: #{forward.1} parent=1 // pred_check
      _
    $region59: #{forward.1} parent=1 // pred_check_branch
      %58 = sbr.rel (0) target = $region61
    $region60: #{forward.1} parent=1 // pred_region
      _
    $region61: #{forward.1} parent=1 // pred_fallthru
      _
    // Predicated region
    $region62: #{forward.1} parent=1 // pred_check
      _
    $region63: #{forward.1} parent=1 // pred_check_branch
      %60 = sbr.rel (0) target = $region65
    $region64: #{forward.1} parent=1 // pred_region
      _
    $region65: #{forward.1} parent=1 // pred_fallthru
      _
    // Predicated region
    $region66: #{forward.1} parent=1 // pred_check
      _
    $region67: #{forward.1} parent=1 // pred_check_branch
      %62 = sbr.rel (0) target = $region69
    $region68: #{forward.1} parent=1 // pred_region
      _
    $region69: #{forward.1} parent=1 // pred_fallthru
      _
    // Predicated region
    $region70: #{forward.1} parent=1 // pred_check
      _
    $region71: #{forward.1} parent=1 // pred_check_branch
      %64 = sbr.rel (0) target = $region73
    $region72: #{forward.1} parent=1 // pred_region
      _
    $region73: #{forward.1} parent=1 // pred_fallthru
      _
    // Predicated region
    $region74: #{forward.1} parent=1 // pred_check
      _
    $region75: #{forward.1} parent=1 // pred_check_branch
      %66 = sbr.rel (0) target = $region77
    $region76: #{forward.1} parent=1 // pred_region
      _
    $region77: #{forward.1} parent=1 // pred_fallthru
      _
    // Predicated region
    $region78: #{forward.1} parent=1 // pred_check
      _
    $region79: #{forward.1} parent=1 // pred_check_branch
      %68 = sbr.rel (0) target = $region81
    $region80: #{forward.1} parent=1 // pred_region
      _
    $region81: #{forward.1} parent=1 // pred_fallthru
      _
    // Predicated region
    $region82: #{forward.1} parent=1 // pred_check
      _
    $region83: #{forward.1} parent=1 // pred_check_branch
      %70 = sbr.rel (0) target = $region85
    $region84: #{forward.1} parent=1 // pred_region
      _
    $region85: #{forward.1} parent=1 // pred_fallthru
      _
    %v72 = vld [vmem:[%s0] sm:$0xff]
    %v73 = vld [vmem:[%s0 + $0x8] sm:$0xff]
    %v74 = vld [vmem:[%s2] sm:$0x1]
    %v75 = vld [vmem:[%s3] sm:$0x1]
    %vm76 = vcmask 261120
    %v77 = vsel %vm76, %v72, 0.0
    %78 = vadd.xlane.f32.xlu0 %v77
    %v79 = vpop.xlane.xlu0 %78
    %v80 = vsel %vm76, %v73, 0.0
    %81 = vadd.xlane.f32.xlu0 %v80
    %v82 = vpop.xlane.xlu0 %81
    %v83 = vrcp.pop 32.0
    %v84 = vmul.f32 %v79, %v83
    %v85 = vmul.f32 %v82, %v83
    %v86 = vsub.f32 %v72, %v84
    %v87 = vsub.f32 %v73, %v85
    %v88 = vmul.f32 %v86, %v86
    %v89 = vmul.f32 %v87, %v87
    %v90 = vsel %vm76, %v88, 0.0
    %91 = vadd.xlane.f32.xlu0 %v90
    %v92 = vpop.xlane.xlu0 %91
    %v93 = vsel %vm76, %v89, 0.0
    %94 = vadd.xlane.f32.xlu0 %v93
    %v95 = vpop.xlane.xlu0 %94
    %v96 = vmul.f32 %v92, %v83
    %v97 = vmul.f32 %v95, %v83
    %v98 = vadd.f32 %v96, 1e-05
    %v99 = vadd.f32 %v97, 1e-05
    %v100 = vrsqrt.pop %v98
    %v101 = vrsqrt.pop %v99
    %v102 = vmul.f32 %v86, %v100
    %v103 = vmul.f32 %v87, %v101
    %v105 = vlaneseq
    %v106 = vshrl.u32 %v105, 7
    %v107 = vsub.s32 0, %v106
    %v108 = vrot.slane %v74, %v107
    %v110 = vmul.f32 %v102, %v108
    %v111 = vmul.f32 %v103, %v108
    %v113 = vlaneseq
    %v114 = vshrl.u32 %v113, 7
    %v115 = vsub.s32 0, %v114
    %v116 = vrot.slane %v75, %v115
    %v118 = vadd.f32 %v110, %v116
    %v119 = vadd.f32 %v111, %v116
    %v120 = vpack.c.bf16 %v119, %v118
    %v121 = vld [vmem:[%s4] sm:$0xf]
    %v122 = vld [vmem:[%s4 + $0x4] sm:$0xf]
    %v123 = vld [vmem:[%s4 + $0x8] sm:$0xf]
    %v124 = vld [vmem:[%s4 + $0xc] sm:$0xf]
    %v125 = vld [vmem:[%s5] sm:$0x1]
    %v127 = vlaneseq
    %v128 = vshrl.u32 %v127, 7
    %v129 = vsub.s32 0, %v128
    %v130 = vrot.slane %v125, %v129
    %v136 = vunpack.c.l.b16 %v121
    %v137 = vunpack.c.l.b16 %v122
    %v138 = vunpack.c.l.b16 %v123
    %v139 = vunpack.c.l.b16 %v124
    %v140 = vpack.c.b16 %v137, %v136
    %v141 = vpack.c.b16 %v139, %v138
    %v145 = vsel %vm76, %v120, 0
    %147 = vmatprep.subr.bf16.mxu0 0
    %148 = vmatpush1.bf16.msra.mxu0 %v140
    %149 = vmatprep.subr.bf16.mxu0 0
    %150 = vmatpush1.bf16.msra.mxu0 %v141
    %151 = vmatprep.subr.bf16.mxu0 0
    %152 = vmatpush1.bf16.msra.mxu0 0
    %153 = vmatprep.subr.bf16.mxu0 0
    %154 = vmatpush1.bf16.msra.mxu0 0
    %155 = vmatprep.subr.bf16.mxu0 0
    %156 = vmatpush1.bf16.msra.mxu0 0
    %157 = vmatprep.subr.bf16.mxu0 0
    %158 = vmatpush1.bf16.msra.mxu0 0
    %159 = vmatprep.subr.bf16.mxu0 0
    %160 = vmatpush1.bf16.msra.mxu0 0
    %161 = vmatprep.subr.bf16.mxu0 0
    %162 = vmatpush1.bf16.msra.mxu0 0
    %163 = vmatprep.subr.bf16.mxu0 0
    %164 = vmatpush1.bf16.msra.mxu0 0
    %165 = vmatprep.subr.bf16.mxu0 0
    %166 = vmatpush1.bf16.msra.mxu0 0
    %167 = vmatprep.subr.bf16.mxu0 0
    %168 = vmatpush1.bf16.msra.mxu0 0
    %169 = vmatprep.subr.bf16.mxu0 0
    %170 = vmatpush1.bf16.msra.mxu0 0
    %171 = vmatprep.subr.bf16.mxu0 0
    %172 = vmatpush1.bf16.msra.mxu0 0
    %173 = vmatprep.subr.bf16.mxu0 0
    %174 = vmatpush1.bf16.msra.mxu0 0
    %175 = vmatprep.subr.bf16.mxu0 0
    %176 = vmatpush1.bf16.msra.mxu0 0
    %177 = vmatprep.subr.bf16.mxu0 0
    %178 = vmatpush1.bf16.msra.mxu0 0
    %179 = vmatprep.mubr.bf16.mxu0 0
    %180 = vmatmul.mubr.bf16.gmra.mrb[0].mxu0 %v145
    %v181 = vpop.f32.mrb[0].mxu0
    %v182 = vadd.f32 %v130, %v181
    %v183 = vpop.f32.mrb[0].mxu0
    %v184 = vpop.f32.mrb[0].mxu0
    %v185 = vadd.f32 %v130, %v184
    %v186 = vpop.f32.mrb[0].mxu0
    %187 = vdwg.mxu0
    %v188 = vld [vmem:[%s1] sm:$0x3]
    %v189 = vpack.c.bf16 %v182, %v182
    %v190 = vlaneseq
    %v191 = vshrl.u32 %v190, 7
    %v192 = vsub.s32 0, %v191
    %v193 = vrot.slane %v188, %v192
    %195 = vrot.lane.b32.xlu0 %v189, 96
    %v196 = vpop.permute.xlu0 %195
    %vm197 = vcmask 130048
    %v199 = vsel %vm197, %v189, 0
    %v202 = vsel %vm197, %v196, 0
    %204 = vmatprep.subr.bf16.mxu0 0
    %205 = vmatpush1.bf16.xpose.msra.mxu0 %v202
    %206 = vmatprep.subr.bf16.mxu0 0
    %207 = vmatpush1.bf16.xpose.msra.mxu0 0
    %208 = vmatprep.subr.bf16.mxu0 0
    %209 = vmatpush1.bf16.xpose.msra.mxu0 0
    %210 = vmatprep.subr.bf16.mxu0 0
    %211 = vmatpush1.bf16.xpose.msra.mxu0 0
    %212 = vmatprep.subr.bf16.mxu0 0
    %213 = vmatpush1.bf16.xpose.msra.mxu0 0
    %214 = vmatprep.subr.bf16.mxu0 0
    %215 = vmatpush1.bf16.xpose.msra.mxu0 0
    %216 = vmatprep.subr.bf16.mxu0 0
    %217 = vmatpush1.bf16.xpose.msra.mxu0 0
    %218 = vmatprep.subr.bf16.mxu0 0
    %219 = vmatpush1.bf16.xpose.msra.mxu0 0
    %220 = vmatprep.subr.bf16.mxu0 0
    %221 = vmatpush1.bf16.xpose.msra.mxu0 0
    %222 = vmatprep.subr.bf16.mxu0 0
    %223 = vmatpush1.bf16.xpose.msra.mxu0 0
    %224 = vmatprep.subr.bf16.mxu0 0
    %225 = vmatpush1.bf16.xpose.msra.mxu0 0
    %226 = vmatprep.subr.bf16.mxu0 0
    %227 = vmatpush1.bf16.xpose.msra.mxu0 0
    %228 = vmatprep.subr.bf16.mxu0 0
    %229 = vmatpush1.bf16.xpose.msra.mxu0 0
    %230 = vmatprep.subr.bf16.mxu0 0
    %231 = vmatpush1.bf16.xpose.msra.mxu0 0
    %232 = vmatprep.subr.bf16.mxu0 0
    %233 = vmatpush1.bf16.xpose.msra.mxu0 0
    %234 = vmatprep.subr.bf16.mxu0 0
    %235 = vmatpush1.bf16.xpose.msra.mxu0 0
    %236 = vmatprep.mubr.bf16.mxu0 0
    %237 = vmatmul.mubr.bf16.gmra.mrb[0].mxu0 %v199
    %v238 = vpop.f32.mrb[0].mxu0
    %v239 = vadd.f32 %v193, %v238
    %v240 = vpop.f32.mrb[0].mxu0
    %v241 = vpop.f32.mrb[0].mxu0
    %v242 = vpop.f32.mrb[0].mxu0
    %243 = vdwg.mxu0
    %vm244 = vcmask 64512
    %v245 = vsel %vm244, %v239, -inf
    %246 = vmax.xlane.f32.xlu0 %v245
    %v247 = vpop.xlane.xlu0 %246
    %v248 = vsub.f32 %v239, %v247
    %v249 = vmul.f32 %v248, 1.442695
    %v250 = vpow.pop %v249
    %v251 = vsel %vm244, %v250, 0.0
    %252 = vadd.xlane.f32.xlu0 %v251
    %v253 = vpop.xlane.xlu0 %252
    %v254 = vrcp.pop %v253
    %v255 = vmul.f32 %v250, %v254
    %v256 = vpack.c.bf16 %v255, %v255
    %257 = vrot.lane.b32.xlu0 %v189, 64
    %v258 = vpop.permute.xlu0 %257
    %v260 = vsel %vm244, %v256, 0
    %vm262 = vcmask 1043456
    %v264 = vsel %vm262, %v258, 0
    %266 = vmatprep.subr.bf16.mxu0 0
    %267 = vmatpush1.bf16.msra.mxu0 %v264
    %268 = vmatprep.subr.bf16.mxu0 0
    %269 = vmatpush1.bf16.msra.mxu0 0
    %270 = vmatprep.subr.bf16.mxu0 0
    %271 = vmatpush1.bf16.msra.mxu0 0
    %272 = vmatprep.subr.bf16.mxu0 0
    %273 = vmatpush1.bf16.msra.mxu0 0
    %274 = vmatprep.subr.bf16.mxu0 0
    %275 = vmatpush1.bf16.msra.mxu0 0
    %276 = vmatprep.subr.bf16.mxu0 0
    %277 = vmatpush1.bf16.msra.mxu0 0
    %278 = vmatprep.subr.bf16.mxu0 0
    %279 = vmatpush1.bf16.msra.mxu0 0
    %280 = vmatprep.subr.bf16.mxu0 0
    %281 = vmatpush1.bf16.msra.mxu0 0
    %282 = vmatprep.subr.bf16.mxu0 0
    %283 = vmatpush1.bf16.msra.mxu0 0
    %284 = vmatprep.subr.bf16.mxu0 0
    %285 = vmatpush1.bf16.msra.mxu0 0
    %286 = vmatprep.subr.bf16.mxu0 0
    %287 = vmatpush1.bf16.msra.mxu0 0
    %288 = vmatprep.subr.bf16.mxu0 0
    %289 = vmatpush1.bf16.msra.mxu0 0
    %290 = vmatprep.subr.bf16.mxu0 0
    %291 = vmatpush1.bf16.msra.mxu0 0
    %292 = vmatprep.subr.bf16.mxu0 0
    %293 = vmatpush1.bf16.msra.mxu0 0
    %294 = vmatprep.subr.bf16.mxu0 0
    %295 = vmatpush1.bf16.msra.mxu0 0
    %296 = vmatprep.subr.bf16.mxu0 0
    %297 = vmatpush1.bf16.msra.mxu0 0
    %298 = vmatprep.mubr.bf16.mxu0 0
    %299 = vmatmul.mubr.bf16.gmra.mrb[0].mxu0 %v260
    %v300 = vpop.f32.mrb[0].mxu0
    %v301 = vadd.f32 0.0, %v300
    %v302 = vpop.f32.mrb[0].mxu0
    %v303 = vpop.f32.mrb[0].mxu0
    %v304 = vpop.f32.mrb[0].mxu0
    %305 = vdwg.mxu0
    %306 = vrot.lane.b32.xlu0 %v189, 112
    %v307 = vpop.permute.xlu0 %306
    %308 = vrot.lane.b32.xlu0 %v189, 80
    %v309 = vpop.permute.xlu0 %308
    %v311 = vsel %vm197, %v307, 0
    %v314 = vsel %vm197, %v309, 0
    %316 = vmatprep.subr.bf16.mxu0 0
    %317 = vmatpush1.bf16.xpose.msra.mxu0 %v314
    %318 = vmatprep.subr.bf16.mxu0 0
    %319 = vmatpush1.bf16.xpose.msra.mxu0 0
    %320 = vmatprep.subr.bf16.mxu0 0
    %321 = vmatpush1.bf16.xpose.msra.mxu0 0
    %322 = vmatprep.subr.bf16.mxu0 0
    %323 = vmatpush1.bf16.xpose.msra.mxu0 0
    %324 = vmatprep.subr.bf16.mxu0 0
    %325 = vmatpush1.bf16.xpose.msra.mxu0 0
    %326 = vmatprep.subr.bf16.mxu0 0
    %327 = vmatpush1.bf16.xpose.msra.mxu0 0
    %328 = vmatprep.subr.bf16.mxu0 0
    %329 = vmatpush1.bf16.xpose.msra.mxu0 0
    %330 = vmatprep.subr.bf16.mxu0 0
    %331 = vmatpush1.bf16.xpose.msra.mxu0 0
    %332 = vmatprep.subr.bf16.mxu0 0
    %333 = vmatpush1.bf16.xpose.msra.mxu0 0
    %334 = vmatprep.subr.bf16.mxu0 0
    %335 = vmatpush1.bf16.xpose.msra.mxu0 0
    %336 = vmatprep.subr.bf16.mxu0 0
    %337 = vmatpush1.bf16.xpose.msra.mxu0 0
    %338 = vmatprep.subr.bf16.mxu0 0
    %339 = vmatpush1.bf16.xpose.msra.mxu0 0
    %340 = vmatprep.subr.bf16.mxu0 0
    %341 = vmatpush1.bf16.xpose.msra.mxu0 0
    %342 = vmatprep.subr.bf16.mxu0 0
    %343 = vmatpush1.bf16.xpose.msra.mxu0 0
    %344 = vmatprep.subr.bf16.mxu0 0
    %345 = vmatpush1.bf16.xpose.msra.mxu0 0
    %346 = vmatprep.subr.bf16.mxu0 0
    %347 = vmatpush1.bf16.xpose.msra.mxu0 0
    %348 = vmatprep.mubr.bf16.mxu0 0
    %349 = vmatmul.mubr.bf16.gmra.mrb[0].mxu0 %v311
    %v350 = vpop.f32.mrb[0].mxu0
    %v351 = vadd.f32 %v193, %v350
    %v352 = vpop.f32.mrb[0].mxu0
    %v353 = vpop.f32.mrb[0].mxu0
    %v354 = vpop.f32.mrb[0].mxu0
    %355 = vdwg.mxu0
    %v356 = vsel %vm244, %v351, -inf
    %357 = vmax.xlane.f32.xlu0 %v356
    %v358 = vpop.xlane.xlu0 %357
    %v359 = vsub.f32 %v351, %v358
    %v360 = vmul.f32 %v359, 1.442695
    %v361 = vpow.pop %v360
    %v362 = vsel %vm244, %v361, 0.0
    %363 = vadd.xlane.f32.xlu0 %v362
    %v364 = vpop.xlane.xlu0 %363
    %v365 = vrcp.pop %v364
    %v366 = vmul.f32 %v361, %v365
    %v367 = vpack.c.bf16 %v366, %v366
    %368 = vrot.lane.b32.xlu0 %v189, 48
    %v369 = vpop.permute.xlu0 %368
    %v371 = vsel %vm244, %v367, 0
    %v374 = vsel %vm262, %v369, 0
    %376 = vmatprep.subr.bf16.mxu0 0
    %377 = vmatpush1.bf16.msra.mxu0 %v374
    %378 = vmatprep.subr.bf16.mxu0 0
    %379 = vmatpush1.bf16.msra.mxu0 0
    %380 = vmatprep.subr.bf16.mxu0 0
    %381 = vmatpush1.bf16.msra.mxu0 0
    %382 = vmatprep.subr.bf16.mxu0 0
    %383 = vmatpush1.bf16.msra.mxu0 0
    %384 = vmatprep.subr.bf16.mxu0 0
    %385 = vmatpush1.bf16.msra.mxu0 0
    %386 = vmatprep.subr.bf16.mxu0 0
    %387 = vmatpush1.bf16.msra.mxu0 0
    %388 = vmatprep.subr.bf16.mxu0 0
    %389 = vmatpush1.bf16.msra.mxu0 0
    %390 = vmatprep.subr.bf16.mxu0 0
    %391 = vmatpush1.bf16.msra.mxu0 0
    %392 = vmatprep.subr.bf16.mxu0 0
    %393 = vmatpush1.bf16.msra.mxu0 0
    %394 = vmatprep.subr.bf16.mxu0 0
    %395 = vmatpush1.bf16.msra.mxu0 0
    %396 = vmatprep.subr.bf16.mxu0 0
    %397 = vmatpush1.bf16.msra.mxu0 0
    %398 = vmatprep.subr.bf16.mxu0 0
    %399 = vmatpush1.bf16.msra.mxu0 0
    %400 = vmatprep.subr.bf16.mxu0 0
    %401 = vmatpush1.bf16.msra.mxu0 0
    %402 = vmatprep.subr.bf16.mxu0 0
    %403 = vmatpush1.bf16.msra.mxu0 0
    %404 = vmatprep.subr.bf16.mxu0 0
    %405 = vmatpush1.bf16.msra.mxu0 0
    %406 = vmatprep.subr.bf16.mxu0 0
    %407 = vmatpush1.bf16.msra.mxu0 0
    %408 = vmatprep.mubr.bf16.mxu0 0
    %409 = vmatmul.mubr.bf16.gmra.mrb[0].mxu0 %v371
    %v410 = vpop.f32.mrb[0].mxu0
    %v411 = vadd.f32 0.0, %v410
    %v412 = vpop.f32.mrb[0].mxu0
    %v413 = vpop.f32.mrb[0].mxu0
    %v414 = vpop.f32.mrb[0].mxu0
    %415 = vdwg.mxu0
    %417 = vrot.lane.b32.xlu0 %v411, 16
    %v418 = vpop.permute.xlu0 %417
    %v420 = vsel %vm197, %v301, %v418
    %v421 = vpack.c.bf16 %v185, %v185
    %v422 = vlaneseq
    %v423 = vshrl.u32 %v422, 7
    %v424 = vsub.s32 1, %v423
    %v425 = vrot.slane %v188, %v424
    %427 = vrot.lane.b32.xlu0 %v421, 96
    %v428 = vpop.permute.xlu0 %427
    %v430 = vsel %vm197, %v421, 0
    %v433 = vsel %vm197, %v428, 0
    %435 = vmatprep.subr.bf16.mxu0 0
    %436 = vmatpush1.bf16.xpose.msra.mxu0 %v433
    %437 = vmatprep.subr.bf16.mxu0 0
    %438 = vmatpush1.bf16.xpose.msra.mxu0 0
    %439 = vmatprep.subr.bf16.mxu0 0
    %440 = vmatpush1.bf16.xpose.msra.mxu0 0
    %441 = vmatprep.subr.bf16.mxu0 0
    %442 = vmatpush1.bf16.xpose.msra.mxu0 0
    %443 = vmatprep.subr.bf16.mxu0 0
    %444 = vmatpush1.bf16.xpose.msra.mxu0 0
    %445 = vmatprep.subr.bf16.mxu0 0
    %446 = vmatpush1.bf16.xpose.msra.mxu0 0
    %447 = vmatprep.subr.bf16.mxu0 0
    %448 = vmatpush1.bf16.xpose.msra.mxu0 0
    %449 = vmatprep.subr.bf16.mxu0 0
    %450 = vmatpush1.bf16.xpose.msra.mxu0 0
    %451 = vmatprep.subr.bf16.mxu0 0
    %452 = vmatpush1.bf16.xpose.msra.mxu0 0
    %453 = vmatprep.subr.bf16.mxu0 0
    %454 = vmatpush1.bf16.xpose.msra.mxu0 0
    %455 = vmatprep.subr.bf16.mxu0 0
    %456 = vmatpush1.bf16.xpose.msra.mxu0 0
    %457 = vmatprep.subr.bf16.mxu0 0
    %458 = vmatpush1.bf16.xpose.msra.mxu0 0
    %459 = vmatprep.subr.bf16.mxu0 0
    %460 = vmatpush1.bf16.xpose.msra.mxu0 0
    %461 = vmatprep.subr.bf16.mxu0 0
    %462 = vmatpush1.bf16.xpose.msra.mxu0 0
    %463 = vmatprep.subr.bf16.mxu0 0
    %464 = vmatpush1.bf16.xpose.msra.mxu0 0
    %465 = vmatprep.subr.bf16.mxu0 0
    %466 = vmatpush1.bf16.xpose.msra.mxu0 0
    %467 = vmatprep.mubr.bf16.mxu0 0
    %468 = vmatmul.mubr.bf16.gmra.mrb[0].mxu0 %v430
    %v469 = vpop.f32.mrb[0].mxu0
    %v470 = vadd.f32 %v425, %v469
    %v471 = vpop.f32.mrb[0].mxu0
    %v472 = vpop.f32.mrb[0].mxu0
    %v473 = vpop.f32.mrb[0].mxu0
    %474 = vdwg.mxu0
    %v475 = vsel %vm244, %v470, -inf
    %476 = vmax.xlane.f32.xlu0 %v475
    %v477 = vpop.xlane.xlu0 %476
    %v478 = vsub.f32 %v470, %v477
    %v479 = vmul.f32 %v478, 1.442695
    %v480 = vpow.pop %v479
    %v481 = vsel %vm244, %v480, 0.0
    %482 = vadd.xlane.f32.xlu0 %v481
    %v483 = vpop.xlane.xlu0 %482
    %v484 = vrcp.pop %v483
    %v485 = vmul.f32 %v480, %v484
    %v486 = vpack.c.bf16 %v485, %v485
    %487 = vrot.lane.b32.xlu0 %v421, 64
    %v488 = vpop.permute.xlu0 %487
    %v490 = vsel %vm244, %v486, 0
    %v493 = vsel %vm262, %v488, 0
    %495 = vmatprep.subr.bf16.mxu0 0
    %496 = vmatpush1.bf16.msra.mxu0 %v493
    %497 = vmatprep.subr.bf16.mxu0 0
    %498 = vmatpush1.bf16.msra.mxu0 0
    %499 = vmatprep.subr.bf16.mxu0 0
    %500 = vmatpush1.bf16.msra.mxu0 0
    %501 = vmatprep.subr.bf16.mxu0 0
    %502 = vmatpush1.bf16.msra.mxu0 0
    %503 = vmatprep.subr.bf16.mxu0 0
    %504 = vmatpush1.bf16.msra.mxu0 0
    %505 = vmatprep.subr.bf16.mxu0 0
    %506 = vmatpush1.bf16.msra.mxu0 0
    %507 = vmatprep.subr.bf16.mxu0 0
    %508 = vmatpush1.bf16.msra.mxu0 0
    %509 = vmatprep.subr.bf16.mxu0 0
    %510 = vmatpush1.bf16.msra.mxu0 0
    %511 = vmatprep.subr.bf16.mxu0 0
    %512 = vmatpush1.bf16.msra.mxu0 0
    %513 = vmatprep.subr.bf16.mxu0 0
    %514 = vmatpush1.bf16.msra.mxu0 0
    %515 = vmatprep.subr.bf16.mxu0 0
    %516 = vmatpush1.bf16.msra.mxu0 0
    %517 = vmatprep.subr.bf16.mxu0 0
    %518 = vmatpush1.bf16.msra.mxu0 0
    %519 = vmatprep.subr.bf16.mxu0 0
    %520 = vmatpush1.bf16.msra.mxu0 0
    %521 = vmatprep.subr.bf16.mxu0 0
    %522 = vmatpush1.bf16.msra.mxu0 0
    %523 = vmatprep.subr.bf16.mxu0 0
    %524 = vmatpush1.bf16.msra.mxu0 0
    %525 = vmatprep.subr.bf16.mxu0 0
    %526 = vmatpush1.bf16.msra.mxu0 0
    %527 = vmatprep.mubr.bf16.mxu0 0
    %528 = vmatmul.mubr.bf16.gmra.mrb[0].mxu0 %v490
    %v529 = vpop.f32.mrb[0].mxu0
    %v530 = vadd.f32 0.0, %v529
    %v531 = vpop.f32.mrb[0].mxu0
    %v532 = vpop.f32.mrb[0].mxu0
    %v533 = vpop.f32.mrb[0].mxu0
    %534 = vdwg.mxu0
    %535 = vrot.lane.b32.xlu0 %v421, 112
    %v536 = vpop.permute.xlu0 %535
    %537 = vrot.lane.b32.xlu0 %v421, 80
    %v538 = vpop.permute.xlu0 %537
    %v540 = vsel %vm197, %v536, 0
    %v543 = vsel %vm197, %v538, 0
    %545 = vmatprep.subr.bf16.mxu0 0
    %546 = vmatpush1.bf16.xpose.msra.mxu0 %v543
    %547 = vmatprep.subr.bf16.mxu0 0
    %548 = vmatpush1.bf16.xpose.msra.mxu0 0
    %549 = vmatprep.subr.bf16.mxu0 0
    %550 = vmatpush1.bf16.xpose.msra.mxu0 0
    %551 = vmatprep.subr.bf16.mxu0 0
    %552 = vmatpush1.bf16.xpose.msra.mxu0 0
    %553 = vmatprep.subr.bf16.mxu0 0
    %554 = vmatpush1.bf16.xpose.msra.mxu0 0
    %555 = vmatprep.subr.bf16.mxu0 0
    %556 = vmatpush1.bf16.xpose.msra.mxu0 0
    %557 = vmatprep.subr.bf16.mxu0 0
    %558 = vmatpush1.bf16.xpose.msra.mxu0 0
    %559 = vmatprep.subr.bf16.mxu0 0
    %560 = vmatpush1.bf16.xpose.msra.mxu0 0
    %561 = vmatprep.subr.bf16.mxu0 0
    %562 = vmatpush1.bf16.xpose.msra.mxu0 0
    %563 = vmatprep.subr.bf16.mxu0 0
    %564 = vmatpush1.bf16.xpose.msra.mxu0 0
    %565 = vmatprep.subr.bf16.mxu0 0
    %566 = vmatpush1.bf16.xpose.msra.mxu0 0
    %567 = vmatprep.subr.bf16.mxu0 0
    %568 = vmatpush1.bf16.xpose.msra.mxu0 0
    %569 = vmatprep.subr.bf16.mxu0 0
    %570 = vmatpush1.bf16.xpose.msra.mxu0 0
    %571 = vmatprep.subr.bf16.mxu0 0
    %572 = vmatpush1.bf16.xpose.msra.mxu0 0
    %573 = vmatprep.subr.bf16.mxu0 0
    %574 = vmatpush1.bf16.xpose.msra.mxu0 0
    %575 = vmatprep.subr.bf16.mxu0 0
    %576 = vmatpush1.bf16.xpose.msra.mxu0 0
    %577 = vmatprep.mubr.bf16.mxu0 0
    %578 = vmatmul.mubr.bf16.gmra.mrb[0].mxu0 %v540
    %v579 = vpop.f32.mrb[0].mxu0
    %v580 = vadd.f32 %v425, %v579
    %v581 = vpop.f32.mrb[0].mxu0
    %v582 = vpop.f32.mrb[0].mxu0
    %v583 = vpop.f32.mrb[0].mxu0
    %584 = vdwg.mxu0
    %v585 = vsel %vm244, %v580, -inf
    %586 = vmax.xlane.f32.xlu0 %v585
    %v587 = vpop.xlane.xlu0 %586
    %v588 = vsub.f32 %v580, %v587
    %v589 = vmul.f32 %v588, 1.442695
    %v590 = vpow.pop %v589
    %v591 = vsel %vm244, %v590, 0.0
    %592 = vadd.xlane.f32.xlu0 %v591
    %v593 = vpop.xlane.xlu0 %592
    %v594 = vrcp.pop %v593
    %v595 = vmul.f32 %v590, %v594
    %v596 = vpack.c.bf16 %v595, %v595
    %597 = vrot.lane.b32.xlu0 %v421, 48
    %v598 = vpop.permute.xlu0 %597
    %v600 = vsel %vm244, %v596, 0
    %v603 = vsel %vm262, %v598, 0
    %605 = vmatprep.subr.bf16.mxu0 0
    %606 = vmatpush1.bf16.msra.mxu0 %v603
    %607 = vmatprep.subr.bf16.mxu0 0
    %608 = vmatpush1.bf16.msra.mxu0 0
    %609 = vmatprep.subr.bf16.mxu0 0
    %610 = vmatpush1.bf16.msra.mxu0 0
    %611 = vmatprep.subr.bf16.mxu0 0
    %612 = vmatpush1.bf16.msra.mxu0 0
    %613 = vmatprep.subr.bf16.mxu0 0
    %614 = vmatpush1.bf16.msra.mxu0 0
    %615 = vmatprep.subr.bf16.mxu0 0
    %616 = vmatpush1.bf16.msra.mxu0 0
    %617 = vmatprep.subr.bf16.mxu0 0
    %618 = vmatpush1.bf16.msra.mxu0 0
    %619 = vmatprep.subr.bf16.mxu0 0
    %620 = vmatpush1.bf16.msra.mxu0 0
    %621 = vmatprep.subr.bf16.mxu0 0
    %622 = vmatpush1.bf16.msra.mxu0 0
    %623 = vmatprep.subr.bf16.mxu0 0
    %624 = vmatpush1.bf16.msra.mxu0 0
    %625 = vmatprep.subr.bf16.mxu0 0
    %626 = vmatpush1.bf16.msra.mxu0 0
    %627 = vmatprep.subr.bf16.mxu0 0
    %628 = vmatpush1.bf16.msra.mxu0 0
    %629 = vmatprep.subr.bf16.mxu0 0
    %630 = vmatpush1.bf16.msra.mxu0 0
    %631 = vmatprep.subr.bf16.mxu0 0
    %632 = vmatpush1.bf16.msra.mxu0 0
    %633 = vmatprep.subr.bf16.mxu0 0
    %634 = vmatpush1.bf16.msra.mxu0 0
    %635 = vmatprep.subr.bf16.mxu0 0
    %636 = vmatpush1.bf16.msra.mxu0 0
    %637 = vmatprep.mubr.bf16.mxu0 0
    %638 = vmatmul.mubr.bf16.gmra.mrb[0].mxu0 %v600
    %v639 = vpop.f32.mrb[0].mxu0
    %v640 = vadd.f32 0.0, %v639
    %v641 = vpop.f32.mrb[0].mxu0
    %v642 = vpop.f32.mrb[0].mxu0
    %v643 = vpop.f32.mrb[0].mxu0
    %644 = vdwg.mxu0
    %646 = vrot.lane.b32.xlu0 %v640, 16
    %v647 = vpop.permute.xlu0 %646
    %v649 = vsel %vm197, %v530, %v647
    %v650 = vpack.c.bf16 %v649, %v420
    %v651 = vld [vmem:[%s6] sm:$0xf]
    %v652 = vld [vmem:[%s6 + $0x4] sm:$0xf]
    %v653 = vld [vmem:[%s6 + $0x8] sm:$0xf]
    %v654 = vld [vmem:[%s6 + $0xc] sm:$0xf]
    %v655 = vld [vmem:[%s7] sm:$0x1]
    %v657 = vlaneseq
    %v658 = vshrl.u32 %v657, 7
    %v659 = vsub.s32 0, %v658
    %v660 = vrot.slane %v655, %v659
    %v666 = vunpack.c.l.b16 %v651
    %v667 = vunpack.c.l.b16 %v652
    %v668 = vunpack.c.l.b16 %v653
    %v669 = vunpack.c.l.b16 %v654
    %v670 = vpack.c.b16 %v667, %v666
    %v671 = vpack.c.b16 %v669, %v668
    %v675 = vsel %vm76, %v650, 0
    %677 = vmatprep.subr.bf16.mxu0 0
    %678 = vmatpush1.bf16.msra.mxu0 %v670
    %679 = vmatprep.subr.bf16.mxu0 0
    %680 = vmatpush1.bf16.msra.mxu0 %v671
    %681 = vmatprep.subr.bf16.mxu0 0
    %682 = vmatpush1.bf16.msra.mxu0 0
    %683 = vmatprep.subr.bf16.mxu0 0
    %684 = vmatpush1.bf16.msra.mxu0 0
    %685 = vmatprep.subr.bf16.mxu0 0
    %686 = vmatpush1.bf16.msra.mxu0 0
    %687 = vmatprep.subr.bf16.mxu0 0
    %688 = vmatpush1.bf16.msra.mxu0 0
    %689 = vmatprep.subr.bf16.mxu0 0
    %690 = vmatpush1.bf16.msra.mxu0 0
    %691 = vmatprep.subr.bf16.mxu0 0
    %692 = vmatpush1.bf16.msra.mxu0 0
    %693 = vmatprep.subr.bf16.mxu0 0
    %694 = vmatpush1.bf16.msra.mxu0 0
    %695 = vmatprep.subr.bf16.mxu0 0
    %696 = vmatpush1.bf16.msra.mxu0 0
    %697 = vmatprep.subr.bf16.mxu0 0
    %698 = vmatpush1.bf16.msra.mxu0 0
    %699 = vmatprep.subr.bf16.mxu0 0
    %700 = vmatpush1.bf16.msra.mxu0 0
    %701 = vmatprep.subr.bf16.mxu0 0
    %702 = vmatpush1.bf16.msra.mxu0 0
    %703 = vmatprep.subr.bf16.mxu0 0
    %704 = vmatpush1.bf16.msra.mxu0 0
    %705 = vmatprep.subr.bf16.mxu0 0
    %706 = vmatpush1.bf16.msra.mxu0 0
    %707 = vmatprep.subr.bf16.mxu0 0
    %708 = vmatpush1.bf16.msra.mxu0 0
    %709 = vmatprep.mubr.bf16.mxu0 0
    %710 = vmatmul.mubr.bf16.gmra.mrb[0].mxu0 %v675
    %v711 = vpop.f32.mrb[0].mxu0
    %v712 = vadd.f32 %v660, %v711
    %v713 = vpop.f32.mrb[0].mxu0
    %v714 = vpop.f32.mrb[0].mxu0
    %v715 = vadd.f32 %v660, %v714
    %v716 = vpop.f32.mrb[0].mxu0
    %717 = vdwg.mxu0
    %v718 = vadd.f32 %v118, %v712
    %v719 = vadd.f32 %v119, %v715
    %v720 = vld [vmem:[%s8] sm:$0x1]
    %v721 = vld [vmem:[%s9] sm:$0x1]
    %v722 = vsel %vm76, %v718, 0.0
    %723 = vadd.xlane.f32.xlu0 %v722
    %v724 = vpop.xlane.xlu0 %723
    %v725 = vsel %vm76, %v719, 0.0
    %726 = vadd.xlane.f32.xlu0 %v725
    %v727 = vpop.xlane.xlu0 %726
    %v728 = vmul.f32 %v724, %v83
    %v729 = vmul.f32 %v727, %v83
    %v730 = vsub.f32 %v718, %v728
    %v731 = vsub.f32 %v719, %v729
    %v732 = vmul.f32 %v730, %v730
    %v733 = vmul.f32 %v731, %v731
    %v734 = vsel %vm76, %v732, 0.0
    %735 = vadd.xlane.f32.xlu0 %v734
    %v736 = vpop.xlane.xlu0 %735
    %v737 = vsel %vm76, %v733, 0.0
    %738 = vadd.xlane.f32.xlu0 %v737
    %v739 = vpop.xlane.xlu0 %738
    %v740 = vmul.f32 %v736, %v83
    %v741 = vmul.f32 %v739, %v83
    %v742 = vadd.f32 %v740, 1e-05
    %v743 = vadd.f32 %v741, 1e-05
    %v744 = vrsqrt.pop %v742
    %v745 = vrsqrt.pop %v743
    %v746 = vmul.f32 %v730, %v744
    %v747 = vmul.f32 %v731, %v745
    %v749 = vlaneseq
    %v750 = vshrl.u32 %v749, 7
    %v751 = vsub.s32 0, %v750
    %v752 = vrot.slane %v720, %v751
    %v754 = vmul.f32 %v746, %v752
    %v755 = vmul.f32 %v747, %v752
    %v757 = vlaneseq
    %v758 = vshrl.u32 %v757, 7
    %v759 = vsub.s32 0, %v758
    %v760 = vrot.slane %v721, %v759
    %v762 = vadd.f32 %v754, %v760
    %v763 = vadd.f32 %v755, %v760
    %v764 = vpack.c.bf16 %v763, %v762
    %v765 = vld [vmem:[%s10] sm:$0xf]
    %v766 = vld [vmem:[%s10 + $0x4] sm:$0xf]
    %v767 = vld [vmem:[%s10 + $0x8] sm:$0xf]
    %v768 = vld [vmem:[%s10 + $0xc] sm:$0xf]
    %v769 = vld [vmem:[%s11] sm:$0x1]
    %v771 = vlaneseq
    %v772 = vshrl.u32 %v771, 7
    %v773 = vsub.s32 0, %v772
    %v774 = vrot.slane %v769, %v773
    %v780 = vunpack.c.l.b16 %v765
    %v781 = vunpack.c.l.b16 %v766
    %v782 = vunpack.c.l.b16 %v767
    %v783 = vunpack.c.l.b16 %v768
    %v784 = vpack.c.b16 %v781, %v780
    %v785 = vpack.c.b16 %v783, %v782
    %v789 = vsel %vm76, %v764, 0
    %791 = vmatprep.subr.bf16.mxu0 0
    %792 = vmatpush1.bf16.msra.mxu0 %v784
    %793 = vmatprep.subr.bf16.mxu0 0
    %794 = vmatpush1.bf16.msra.mxu0 %v785
    %795 = vmatprep.subr.bf16.mxu0 0
    %796 = vmatpush1.bf16.msra.mxu0 0
    %797 = vmatprep.subr.bf16.mxu0 0
    %798 = vmatpush1.bf16.msra.mxu0 0
    %799 = vmatprep.subr.bf16.mxu0 0
    %800 = vmatpush1.bf16.msra.mxu0 0
    %801 = vmatprep.subr.bf16.mxu0 0
    %802 = vmatpush1.bf16.msra.mxu0 0
    %803 = vmatprep.subr.bf16.mxu0 0
    %804 = vmatpush1.bf16.msra.mxu0 0
    %805 = vmatprep.subr.bf16.mxu0 0
    %806 = vmatpush1.bf16.msra.mxu0 0
    %807 = vmatprep.subr.bf16.mxu0 0
    %808 = vmatpush1.bf16.msra.mxu0 0
    %809 = vmatprep.subr.bf16.mxu0 0
    %810 = vmatpush1.bf16.msra.mxu0 0
    %811 = vmatprep.subr.bf16.mxu0 0
    %812 = vmatpush1.bf16.msra.mxu0 0
    %813 = vmatprep.subr.bf16.mxu0 0
    %814 = vmatpush1.bf16.msra.mxu0 0
    %815 = vmatprep.subr.bf16.mxu0 0
    %816 = vmatpush1.bf16.msra.mxu0 0
    %817 = vmatprep.subr.bf16.mxu0 0
    %818 = vmatpush1.bf16.msra.mxu0 0
    %819 = vmatprep.subr.bf16.mxu0 0
    %820 = vmatpush1.bf16.msra.mxu0 0
    %821 = vmatprep.subr.bf16.mxu0 0
    %822 = vmatpush1.bf16.msra.mxu0 0
    %823 = vmatprep.mubr.bf16.mxu0 0
    %824 = vmatmul.mubr.bf16.gmra.mrb[0].mxu0 %v789
    %v825 = vpop.f32.mrb[0].mxu0
    %v826 = vadd.f32 %v774, %v825
    %v827 = vpop.f32.mrb[0].mxu0
    %v828 = vpop.f32.mrb[0].mxu0
    %v829 = vadd.f32 %v774, %v828
    %v830 = vpop.f32.mrb[0].mxu0
    %831 = vdwg.mxu0
    %v832 = vmul.f32 %v826, %v826
    %v833 = vmul.f32 %v829, %v829
    %v834 = vmul.f32 %v826, %v832
    %v835 = vmul.f32 %v829, %v833
    %v836 = vmul.f32 %v834, 0.044715
    %v837 = vmul.f32 %v835, 0.044715
    %v838 = vadd.f32 %v826, %v836
    %v839 = vadd.f32 %v829, %v837
    %v840 = vmul.f32 %v838, 0.7978846
    %v841 = vmul.f32 %v839, 0.7978846
    %v842 = vtanh.pop %v840
    %v843 = vtanh.pop %v841
    %v844 = vadd.f32 %v842, 1.0
    %v845 = vadd.f32 %v843, 1.0
    %v846 = vmul.f32 %v844, 0.5
    %v847 = vmul.f32 %v845, 0.5
    %v848 = vmul.f32 %v826, %v846
    %v849 = vmul.f32 %v829, %v847
    %v850 = vpack.c.bf16 %v849, %v848
    %v851 = vld [vmem:[%s12] sm:$0xf]
    %v852 = vld [vmem:[%s12 + $0x4] sm:$0xf]
    %v853 = vld [vmem:[%s12 + $0x8] sm:$0xf]
    %v854 = vld [vmem:[%s12 + $0xc] sm:$0xf]
    %v855 = vld [vmem:[%s12 + $0x10] sm:$0xf]
    %v856 = vld [vmem:[%s12 + $0x14] sm:$0xf]
    %v857 = vld [vmem:[%s12 + $0x18] sm:$0xf]
    %v858 = vld [vmem:[%s12 + $0x1c] sm:$0xf]
    %v859 = vld [vmem:[%s13] sm:$0x1]
    %v861 = vlaneseq
    %v862 = vshrl.u32 %v861, 7
    %v863 = vsub.s32 0, %v862
    %v864 = vrot.slane %v859, %v863
    %v874 = vunpack.c.l.b16 %v851
    %v875 = vunpack.c.l.b16 %v852
    %v876 = vunpack.c.l.b16 %v853
    %v877 = vunpack.c.l.b16 %v854
    %v878 = vunpack.c.l.b16 %v855
    %v879 = vunpack.c.l.b16 %v856
    %v880 = vunpack.c.l.b16 %v857
    %v881 = vunpack.c.l.b16 %v858
    %v882 = vpack.c.b16 %v875, %v874
    %v883 = vpack.c.b16 %v877, %v876
    %v884 = vpack.c.b16 %v879, %v878
    %v885 = vpack.c.b16 %v881, %v880
    %vm890 = vcmask 523264
    %v892 = vsel %vm890, %v850, 0
    %894 = vmatprep.subr.bf16.mxu0 0
    %895 = vmatpush1.bf16.msra.mxu0 %v882
    %896 = vmatprep.subr.bf16.mxu0 0
    %897 = vmatpush1.bf16.msra.mxu0 %v883
    %898 = vmatprep.subr.bf16.mxu0 0
    %899 = vmatpush1.bf16.msra.mxu0 %v884
    %900 = vmatprep.subr.bf16.mxu0 0
    %901 = vmatpush1.bf16.msra.mxu0 %v885
    %902 = vmatprep.subr.bf16.mxu0 0
    %903 = vmatpush1.bf16.msra.mxu0 0
    %904 = vmatprep.subr.bf16.mxu0 0
    %905 = vmatpush1.bf16.msra.mxu0 0
    %906 = vmatprep.subr.bf16.mxu0 0
    %907 = vmatpush1.bf16.msra.mxu0 0
    %908 = vmatprep.subr.bf16.mxu0 0
    %909 = vmatpush1.bf16.msra.mxu0 0
    %910 = vmatprep.subr.bf16.mxu0 0
    %911 = vmatpush1.bf16.msra.mxu0 0
    %912 = vmatprep.subr.bf16.mxu0 0
    %913 = vmatpush1.bf16.msra.mxu0 0
    %914 = vmatprep.subr.bf16.mxu0 0
    %915 = vmatpush1.bf16.msra.mxu0 0
    %916 = vmatprep.subr.bf16.mxu0 0
    %917 = vmatpush1.bf16.msra.mxu0 0
    %918 = vmatprep.subr.bf16.mxu0 0
    %919 = vmatpush1.bf16.msra.mxu0 0
    %920 = vmatprep.subr.bf16.mxu0 0
    %921 = vmatpush1.bf16.msra.mxu0 0
    %922 = vmatprep.subr.bf16.mxu0 0
    %923 = vmatpush1.bf16.msra.mxu0 0
    %924 = vmatprep.subr.bf16.mxu0 0
    %925 = vmatpush1.bf16.msra.mxu0 0
    %926 = vmatprep.mubr.bf16.mxu0 0
    %927 = vmatmul.mubr.bf16.gmra.mrb[0].mxu0 %v892
    %v928 = vpop.f32.mrb[0].mxu0
    %v929 = vadd.f32 %v864, %v928
    %v930 = vpop.f32.mrb[0].mxu0
    %v931 = vpop.f32.mrb[0].mxu0
    %v932 = vadd.f32 %v864, %v931
    %v933 = vpop.f32.mrb[0].mxu0
    %934 = vdwg.mxu0
    %v935 = vadd.f32 %v762, %v929
    %v936 = vadd.f32 %v763, %v932
    %v937 = vld [vmem:[%s14] sm:$0x1]
    %v938 = vld [vmem:[%s15] sm:$0x1]
    %v939 = vsel %vm76, %v935, 0.0
    %940 = vadd.xlane.f32.xlu0 %v939
    %v941 = vpop.xlane.xlu0 %940
    %v942 = vsel %vm76, %v936, 0.0
    %943 = vadd.xlane.f32.xlu0 %v942
    %v944 = vpop.xlane.xlu0 %943
    %v945 = vmul.f32 %v941, %v83
    %v946 = vmul.f32 %v944, %v83
    %v947 = vsub.f32 %v935, %v945
    %v948 = vsub.f32 %v936, %v946
    %v949 = vmul.f32 %v947, %v947
    %v950 = vmul.f32 %v948, %v948
    %v951 = vsel %vm76, %v949, 0.0
    %952 = vadd.xlane.f32.xlu0 %v951
    %v953 = vpop.xlane.xlu0 %952
    %v954 = vsel %vm76, %v950, 0.0
    %955 = vadd.xlane.f32.xlu0 %v954
    %v956 = vpop.xlane.xlu0 %955
    %v957 = vmul.f32 %v953, %v83
    %v958 = vmul.f32 %v956, %v83
    %v959 = vadd.f32 %v957, 1e-05
    %v960 = vadd.f32 %v958, 1e-05
    %v961 = vrsqrt.pop %v959
    %v962 = vrsqrt.pop %v960
    %v963 = vmul.f32 %v947, %v961
    %v964 = vmul.f32 %v948, %v962
    %v966 = vlaneseq
    %v967 = vshrl.u32 %v966, 7
    %v968 = vsub.s32 0, %v967
    %v969 = vrot.slane %v937, %v968
    %v971 = vmul.f32 %v963, %v969
    %v972 = vmul.f32 %v964, %v969
    %v974 = vlaneseq
    %v975 = vshrl.u32 %v974, 7
    %v976 = vsub.s32 0, %v975
    %v977 = vrot.slane %v938, %v976
    %v979 = vadd.f32 %v971, %v977
    %v980 = vadd.f32 %v972, %v977
    %v981 = vpack.c.bf16 %v980, %v979
    %v982 = vld [vmem:[%s16] sm:$0xf]
    %v983 = vld [vmem:[%s16 + $0x4] sm:$0xf]
    %v984 = vld [vmem:[%s16 + $0x8] sm:$0xf]
    %v985 = vld [vmem:[%s16 + $0xc] sm:$0xf]
    %v990 = vunpack.c.l.b16 %v982
    %v991 = vunpack.c.l.b16 %v983
    %v992 = vunpack.c.l.b16 %v984
    %v993 = vunpack.c.l.b16 %v985
    %v994 = vpack.c.b16 %v991, %v990
    %v995 = vpack.c.b16 %v993, %v992
    %v999 = vsel %vm76, %v981, 0
    %1001 = vmatprep.subr.bf16.mxu0 0
    %1002 = vmatpush1.bf16.msra.mxu0 %v994
    %1003 = vmatprep.subr.bf16.mxu0 0
    %1004 = vmatpush1.bf16.msra.mxu0 %v995
    %1005 = vmatprep.subr.bf16.mxu0 0
    %1006 = vmatpush1.bf16.msra.mxu0 0
    %1007 = vmatprep.subr.bf16.mxu0 0
    %1008 = vmatpush1.bf16.msra.mxu0 0
    %1009 = vmatprep.subr.bf16.mxu0 0
    %1010 = vmatpush1.bf16.msra.mxu0 0
    %1011 = vmatprep.subr.bf16.mxu0 0
    %1012 = vmatpush1.bf16.msra.mxu0 0
    %1013 = vmatprep.subr.bf16.mxu0 0
    %1014 = vmatpush1.bf16.msra.mxu0 0
    %1015 = vmatprep.subr.bf16.mxu0 0
    %1016 = vmatpush1.bf16.msra.mxu0 0
    %1017 = vmatprep.subr.bf16.mxu0 0
    %1018 = vmatpush1.bf16.msra.mxu0 0
    %1019 = vmatprep.subr.bf16.mxu0 0
    %1020 = vmatpush1.bf16.msra.mxu0 0
    %1021 = vmatprep.subr.bf16.mxu0 0
    %1022 = vmatpush1.bf16.msra.mxu0 0
    %1023 = vmatprep.subr.bf16.mxu0 0
    %1024 = vmatpush1.bf16.msra.mxu0 0
    %1025 = vmatprep.subr.bf16.mxu0 0
    %1026 = vmatpush1.bf16.msra.mxu0 0
    %1027 = vmatprep.subr.bf16.mxu0 0
    %1028 = vmatpush1.bf16.msra.mxu0 0
    %1029 = vmatprep.subr.bf16.mxu0 0
    %1030 = vmatpush1.bf16.msra.mxu0 0
    %1031 = vmatprep.subr.bf16.mxu0 0
    %1032 = vmatpush1.bf16.msra.mxu0 0
    %1033 = vmatprep.mubr.bf16.mxu0 0
    %1034 = vmatmul.mubr.bf16.gmra.mrb[0].mxu0 %v999
    %v1035 = vpop.f32.mrb[0].mxu0
    %v1036 = vadd.f32 0.0, %v1035
    %v1037 = vpop.f32.mrb[0].mxu0
    %v1038 = vpop.f32.mrb[0].mxu0
    %v1039 = vadd.f32 0.0, %v1038
    %v1040 = vpop.f32.mrb[0].mxu0
    %1041 = vdwg.mxu0
    %v1042 = vld [vmem:[%s17] sm:$0x1]
    %v1044 = vlaneseq
    %v1045 = vshrl.u32 %v1044, 7
    %v1046 = vsub.s32 0, %v1045
    %v1047 = vrot.slane %v1042, %v1046
    %v1049 = vadd.f32 %v1036, %v1047
    %v1050 = vadd.f32 %v1039, %v1047
    %v1051 = vmax.f32 %v1049, 0.0
    %v1052 = vmax.f32 %v1050, 0.0
    %1055 = vrot.lane.b32.xlu0 %v1051, 96
    %v1056 = vpop.permute.xlu0 %1055
    %1057 = vrot.lane.b32.xlu0 %v1052, 96
    %v1058 = vpop.permute.xlu0 %1057
    %v1061 = vadd.f32 %v1051, %v1056
    %v1062 = vadd.f32 %v1052, %v1058
    %1063 = vst.msk [vmem:[#allocation2] sm:$0xff] %vm76, %v1061
    %1064 = vst.msk [vmem:[#allocation2 + $0x8] sm:$0xff] %vm76, %v1062
    %v1065 = vpack.c.bf16 %v1052, %v1051
    %v1066 = vld [vmem:[%s18] sm:$0xf]
    %v1067 = vld [vmem:[%s18 + $0x4] sm:$0xf]
    %v1068 = vld [vmem:[%s18 + $0x8] sm:$0xf]
    %v1069 = vld [vmem:[%s18 + $0xc] sm:$0xf]
    %v1070 = vld [vmem:[%s19] sm:$0xf]
    %v1071 = vld [vmem:[%s19 + $0x4] sm:$0xf]
    %v1072 = vld [vmem:[%s19 + $0x8] sm:$0xf]
    %v1073 = vld [vmem:[%s19 + $0xc] sm:$0xf]
    %1075 = vrot.lane.b32.xlu0 %v1065, 96
    %v1076 = vpop.permute.xlu0 %1075
    %v1081 = vunpack.c.l.b16 %v1070
    %v1082 = vunpack.c.l.b16 %v1071
    %v1083 = vunpack.c.l.b16 %v1072
    %v1084 = vunpack.c.l.b16 %v1073
    %v1085 = vpack.c.b16 %v1082, %v1081
    %v1086 = vpack.c.b16 %v1084, %v1083
    %v1090 = vsel %vm76, %v1076, 0
    %1092 = vmatprep.subr.bf16.mxu0 0
    %1093 = vmatpush1.bf16.msra.mxu0 %v1085
    %1094 = vmatprep.subr.bf16.mxu0 0
    %1095 = vmatpush1.bf16.msra.mxu0 %v1086
    %1096 = vmatprep.subr.bf16.mxu0 0
    %1097 = vmatpush1.bf16.msra.mxu0 0
    %1098 = vmatprep.subr.bf16.mxu0 0
    %1099 = vmatpush1.bf16.msra.mxu0 0
    %1100 = vmatprep.subr.bf16.mxu0 0
    %1101 = vmatpush1.bf16.msra.mxu0 0
    %1102 = vmatprep.subr.bf16.mxu0 0
    %1103 = vmatpush1.bf16.msra.mxu0 0
    %1104 = vmatprep.subr.bf16.mxu0 0
    %1105 = vmatpush1.bf16.msra.mxu0 0
    %1106 = vmatprep.subr.bf16.mxu0 0
    %1107 = vmatpush1.bf16.msra.mxu0 0
    %1108 = vmatprep.subr.bf16.mxu0 0
    %1109 = vmatpush1.bf16.msra.mxu0 0
    %1110 = vmatprep.subr.bf16.mxu0 0
    %1111 = vmatpush1.bf16.msra.mxu0 0
    %1112 = vmatprep.subr.bf16.mxu0 0
    %1113 = vmatpush1.bf16.msra.mxu0 0
    %1114 = vmatprep.subr.bf16.mxu0 0
    %1115 = vmatpush1.bf16.msra.mxu0 0
    %1116 = vmatprep.subr.bf16.mxu0 0
    %1117 = vmatpush1.bf16.msra.mxu0 0
    %1118 = vmatprep.subr.bf16.mxu0 0
    %1119 = vmatpush1.bf16.msra.mxu0 0
    %1120 = vmatprep.subr.bf16.mxu0 0
    %1121 = vmatpush1.bf16.msra.mxu0 0
    %1122 = vmatprep.subr.bf16.mxu0 0
    %1123 = vmatpush1.bf16.msra.mxu0 0
    %1124 = vmatprep.mubr.bf16.mxu0 0
    %1125 = vmatmul.mubr.bf16.gmra.mrb[0].mxu0 %v1090
    %v1126 = vpop.f32.mrb[0].mxu0
    %v1127 = vadd.f32 0.0, %v1126
    %v1128 = vpop.f32.mrb[0].mxu0
    %v1129 = vpop.f32.mrb[0].mxu0
    %v1130 = vadd.f32 0.0, %v1129
    %v1131 = vpop.f32.mrb[0].mxu0
    %1132 = vdwg.mxu0
    %v1137 = vunpack.c.l.b16 %v1066
    %v1138 = vunpack.c.l.b16 %v1067
    %v1139 = vunpack.c.l.b16 %v1068
    %v1140 = vunpack.c.l.b16 %v1069
    %v1141 = vpack.c.b16 %v1138, %v1137
    %v1142 = vpack.c.b16 %v1140, %v1139
    %v1146 = vsel %vm76, %v1065, 0
    %1148 = vmatprep.subr.bf16.mxu0 0
    %1149 = vmatpush1.bf16.msra.mxu0 %v1141
    %1150 = vmatprep.subr.bf16.mxu0 0
    %1151 = vmatpush1.bf16.msra.mxu0 %v1142
    %1152 = vmatprep.subr.bf16.mxu0 0
    %1153 = vmatpush1.bf16.msra.mxu0 0
    %1154 = vmatprep.subr.bf16.mxu0 0
    %1155 = vmatpush1.bf16.msra.mxu0 0
    %1156 = vmatprep.subr.bf16.mxu0 0
    %1157 = vmatpush1.bf16.msra.mxu0 0
    %1158 = vmatprep.subr.bf16.mxu0 0
    %1159 = vmatpush1.bf16.msra.mxu0 0
    %1160 = vmatprep.subr.bf16.mxu0 0
    %1161 = vmatpush1.bf16.msra.mxu0 0
    %1162 = vmatprep.subr.bf16.mxu0 0
    %1163 = vmatpush1.bf16.msra.mxu0 0
    %1164 = vmatprep.subr.bf16.mxu0 0
    %1165 = vmatpush1.bf16.msra.mxu0 0
    %1166 = vmatprep.subr.bf16.mxu0 0
    %1167 = vmatpush1.bf16.msra.mxu0 0
    %1168 = vmatprep.subr.bf16.mxu0 0
    %1169 = vmatpush1.bf16.msra.mxu0 0
    %1170 = vmatprep.subr.bf16.mxu0 0
    %1171 = vmatpush1.bf16.msra.mxu0 0
    %1172 = vmatprep.subr.bf16.mxu0 0
    %1173 = vmatpush1.bf16.msra.mxu0 0
    %1174 = vmatprep.subr.bf16.mxu0 0
    %1175 = vmatpush1.bf16.msra.mxu0 0
    %1176 = vmatprep.subr.bf16.mxu0 0
    %1177 = vmatpush1.bf16.msra.mxu0 0
    %1178 = vmatprep.subr.bf16.mxu0 0
    %1179 = vmatpush1.bf16.msra.mxu0 0
    %1180 = vmatprep.mubr.bf16.mxu0 0
    %1181 = vmatmul.mubr.bf16.gmra.mrb[0].mxu0 %v1146
    %v1182 = vpop.f32.mrb[0].mxu0
    %v1183 = vadd.f32 %v1127, %v1182
    %v1184 = vpop.f32.mrb[0].mxu0
    %v1185 = vpop.f32.mrb[0].mxu0
    %v1186 = vadd.f32 %v1130, %v1185
    %v1187 = vpop.f32.mrb[0].mxu0
    %1188 = vdwg.mxu0
    %v1189 = vld [vmem:[%s20] sm:$0x1]
    %v1191 = vlaneseq
    %v1192 = vshrl.u32 %v1191, 7
    %v1193 = vsub.s32 0, %v1192
    %v1194 = vrot.slane %v1189, %v1193
    %v1196 = vadd.f32 %v1183, %v1194
    %v1197 = vadd.f32 %v1186, %v1194
    %vm1198 = vcmask 48128
    %1199 = vst.msk [vmem:[%s22] sm:$0xff] %vm1198, %v1196
    %1200 = vst.msk [vmem:[%s22 + $0x8] sm:$0xff] %vm1198, %v1197
    // Predicated region
    $region86: #{forward.1} parent=1 // pred_check
      _
    $region87: #{forward.1} parent=1 // pred_check_branch
      %1202 = sbr.rel (0) target = $region89
    $region88: #{forward.1} parent=1 // pred_region
      %s1204 = ssub.s32 256, 256
      %1205 = vsyncadd [#allocation3], %s1204
      %s1206 = sshll.u32 [#allocation2], 4
      %s1207 = int_to_ptr.vmem [resolvable:$true] %s1206
      %1212 = dma.vmem_to_hbm [thread:$0]  %s1207, 256, %s21, [#allocation3], 128, 128, 8
    $region89: #{forward.1} parent=1 // pred_fallthru
      _
    // Predicated region
    $region90: #{forward.1} parent=1 // pred_check
      _
    $region91: #{forward.1} parent=1 // pred_check_branch
      %1214 = sbr.rel (0) target = $region93
    $region92: #{forward.1} parent=1 // pred_region
      _
    $region93: #{forward.1} parent=1 // pred_fallthru
      _
    // Predicated region
    $region94: #{forward.1} parent=1 // pred_check
      _
    $region95: #{forward.1} parent=1 // pred_check_branch
      %1216 = sbr.rel (0) target = $region97
    $region96: #{forward.1} parent=1 // pred_region
      %1217 = dma.done [#allocation3], 256
    $region97: #{forward.1} parent=1 // pred_fallthru
      _
    // Predicated region
    $region98: #{forward.1} parent=1 // pred_check
      _
    $region99: #{forward.1} parent=1 // pred_check_branch
      %1219 = sbr.rel (0) target = $region101
    $region100: #{forward.1} parent=1 // pred_region
      _
    $region101: #{forward.1} parent=1 // pred_fallthru
      _
    %1220 = vsyncpa [#allocation3], 1

</llo_original>
